<compile_context>
chip_gen: v6e
topology: v6e:2x2x1
jax: 0.10.0
libtpu: 0.0.40
codegen_flags: <defaults>
</compile_context>

<pallas_src>
import functools

import jax
import jax.numpy as jnp
from jax.experimental import pallas as pl
from jax.experimental.pallas import tpu as pltpu

_EPS = 1e-5
_LANE = 128


def _round_up(x, m):
    return (x + m - 1) // m * m


# ----------------------------- Pallas kernels -----------------------------

def _conv_stats_kernel(cols_ref, w_ref, out_ref, stats_ref):
    """One fused matmul tile (pixels x K) @ (K x Nout), plus per-channel sum / sum-of-squares
    accumulated into a resident output block across the pixel grid axis (P3 pattern)."""
    @pl.when(pl.program_id(0) == 0)
    def _init():
        stats_ref[...] = jnp.zeros_like(stats_ref)

    acc = jnp.dot(cols_ref[...], w_ref[...], preferred_element_type=jnp.float32)
    out_ref[...] = acc
    stats_ref[...] += jnp.concatenate(
        [jnp.sum(acc, axis=0, keepdims=True),
         jnp.sum(acc * acc, axis=0, keepdims=True)], axis=0)


def _affine_relu_kernel(x_ref, s_ref, b_ref, o_ref):
    # y = relu(x * scale + shift)  (folded BatchNorm + ReLU)
    o_ref[...] = jnp.maximum(x_ref[...] * s_ref[...] + b_ref[...], 0.0).astype(o_ref.dtype)


def _affine_add_relu_kernel(x_ref, s_ref, b_ref, id_ref, o_ref):
    # y = relu(bn2(conv2) + identity)
    o_ref[...] = jnp.maximum(
        x_ref[...] * s_ref[...] + b_ref[...] + id_ref[...], 0.0).astype(o_ref.dtype)


def _affine2_add_relu_kernel(x_ref, s_ref, b_ref, y_ref, sd_ref, bd_ref, o_ref):
    # y = relu(bn2(conv2) + bn_d(conv_d(x)))
    o_ref[...] = jnp.maximum(
        x_ref[...] * s_ref[...] + b_ref[...] + y_ref[...] * sd_ref[...] + bd_ref[...],
        0.0).astype(o_ref.dtype)


# ----------------------------- pallas_call builders -----------------------------

_CP_ARBITRARY = pltpu.CompilerParams(
    dimension_semantics=("arbitrary",), vmem_limit_bytes=32 * 1024 * 1024)
_CP_PARALLEL = pltpu.CompilerParams(
    dimension_semantics=("parallel",), vmem_limit_bytes=32 * 1024 * 1024)


def _conv_stats_call(cols, w, tp):
    """cols: (npix_pad, k_pad); w: (k_pad, n_out). Returns (raw conv, (2, n_out) sum/sumsq)."""
    npix_pad, k_pad = cols.shape
    n_out = w.shape[1]
    return pl.pallas_call(
        _conv_stats_kernel,
        grid=(npix_pad // tp,),
        in_specs=[
            pl.BlockSpec((tp, k_pad), lambda i: (i, 0)),
            pl.BlockSpec((k_pad, n_out), lambda i: (0, 0)),   # resident weights (DMA'd once)
        ],
        out_specs=[
            pl.BlockSpec((tp, n_out), lambda i: (i, 0)),
            pl.BlockSpec((2, n_out), lambda i: (0, 0)),       # resident stats accumulator
        ],
        out_shape=[
            jax.ShapeDtypeStruct((npix_pad, n_out), jnp.float32),
            jax.ShapeDtypeStruct((2, n_out), jnp.float32),
        ],
        compiler_params=_CP_ARBITRARY,   # stats accumulate across the pixel axis
    )(cols, w)


def _elementwise_call(kernel, operands, col_blocks, tp, npix_pad, c_pad, out_dtype):
    """Tiled elementwise apply.  col_blocks[i] is the column-block index for a (tp, c_pad)
    tile of operand i, or None for a resident (1, c_pad) per-channel vector."""
    in_specs = []
    for cb in col_blocks:
        if cb is None:
            in_specs.append(pl.BlockSpec((1, c_pad), lambda i: (0, 0)))
        else:
            in_specs.append(pl.BlockSpec((tp, c_pad), lambda i, cb=cb: (i, cb)))
    return pl.pallas_call(
        kernel,
        grid=(npix_pad // tp,),
        in_specs=in_specs,
        out_specs=pl.BlockSpec((tp, c_pad), lambda i: (i, 0)),
        out_shape=jax.ShapeDtypeStruct((npix_pad, c_pad), out_dtype),
        compiler_params=_CP_PARALLEL,
    )(*operands)


# ----------------------------- wrapper glue: layout, padding, im2col -----------------------------

def _im2col3x3(y_nhwc, stride, k_pad, npix_pad, dtype):
    """(N,H,W,C) -> (npix_pad, k_pad): 3x3 taps (padding=1) folded into the channel axis."""
    n, h, w, c = y_nhwc.shape
    ho = (h + 2 - 3) // stride + 1
    wo = (w + 2 - 3) // stride + 1
    yp = jnp.pad(y_nhwc, ((0, 0), (1, 1), (1, 1), (0, 0)))
    taps = [yp[:, kh:kh + stride * ho:stride, kw:kw + stride * wo:stride, :]
            for kh in range(3) for kw in range(3)]
    cols = jnp.concatenate(taps, axis=-1).reshape(n * ho * wo, 9 * c)
    cols = jnp.pad(cols, ((0, npix_pad - n * ho * wo), (0, k_pad - 9 * c)))
    return cols.astype(dtype)


def _fold_w3x3(w_oihw, k_pad, c_pad, dtype):
    """PyTorch (Cout,Cin,3,3) -> (k_pad, c_pad) with rows ordered (tap, cin) to match im2col."""
    c_out, c_in = w_oihw.shape[0], w_oihw.shape[1]
    wf = jnp.transpose(w_oihw, (2, 3, 1, 0)).reshape(9 * c_in, c_out)
    wf = jnp.pad(wf, ((0, k_pad - 9 * c_in), (0, c_pad - c_out)))
    return wf.astype(dtype)


def _fold_w1x1_center(wd_oihw, k_pad, c_pad, dtype):
    """Place the 1x1 downsample weight on the centre-tap rows of the 3x3-folded K dim, so the
    downsample conv shares conv1's im2col matrix and matmul."""
    c_out, c_in = wd_oihw.shape[0], wd_oihw.shape[1]
    wd = jnp.transpose(wd_oihw.reshape(c_out, c_in), (1, 0))          # (Cin, Cout)
    wf = jnp.zeros((k_pad, c_pad), jnp.float32).at[4 * c_in:5 * c_in, :c_out].set(wd)
    return wf.astype(dtype)


def _bn_affine(stats, gamma, beta, count, c_pad):
    """Per-channel (scale, shift) of training-mode BN from accumulated sum / sumsq (O(C) work)."""
    c = gamma.shape[0]
    mean = stats[0] / count
    var = jnp.maximum(stats[1] / count - mean * mean, 0.0)            # biased variance
    g = jnp.pad(gamma, (0, c_pad - c))
    b = jnp.pad(beta, (0, c_pad - c))
    scale = g * jax.lax.rsqrt(var + _EPS)
    shift = b - mean * scale
    return scale.reshape(1, c_pad), shift.reshape(1, c_pad)


@functools.partial(jax.jit, static_argnames=("stride", "compute_dtype", "tile_pixels"))
def basic_block_pallas(x_nchw, p, stride=1, *, compute_dtype=jnp.bfloat16, tile_pixels=512):
    n, c_in, h, w = x_nchw.shape
    c_out = p["w1"].shape[0]
    has_ds = (stride != 1) or (c_in != c_out)

    x = jnp.transpose(x_nchw, (0, 2, 3, 1)).astype(jnp.float32)       # NCHW -> NHWC
    ho = (h + 2 - 3) // stride + 1
    wo = (w + 2 - 3) // stride + 1
    npix = n * ho * wo

    c_pad = _round_up(c_out, _LANE)
    k1_pad = _round_up(9 * c_in, _LANE)
    k2_pad = _round_up(9 * c_out, _LANE)
    tp = min(tile_pixels, _round_up(npix, 8))
    npix_pad = _round_up(npix, tp)

    # ---- conv1 (+ fused 1x1 downsample conv) + BN statistics ----
    w1 = _fold_w3x3(p["w1"], k1_pad, c_pad, compute_dtype)
    if has_ds:
        w1 = jnp.concatenate(
            [w1, _fold_w1x1_center(p["wd"], k1_pad, c_pad, compute_dtype)], axis=1)
    cols1 = _im2col3x3(x, stride, k1_pad, npix_pad, compute_dtype)
    raw1, stats1 = _conv_stats_call(cols1, w1, tp)                    # raw1: [conv1 | conv_d]

    # ---- bn1 affine + relu -> y1 (compute dtype, lane-dense) ----
    scale1, shift1 = _bn_affine(stats1[:, :c_pad], p["g1"], p["b1"], npix, c_pad)
    y1 = _elementwise_call(_affine_relu_kernel, [raw1, scale1, shift1],
                           [0, None, None], tp, npix_pad, c_pad, compute_dtype)

    # ---- conv2 + BN statistics ----
    w2 = _fold_w3x3(p["w2"], k2_pad, c_pad, compute_dtype)
    cols2 = _im2col3x3(y1[:npix, :c_out].reshape(n, ho, wo, c_out), 1,
                       k2_pad, npix_pad, compute_dtype)
    raw2, stats2 = _conv_stats_call(cols2, w2, tp)
    scale2, shift2 = _bn_affine(stats2, p["g2"], p["b2"], npix, c_pad)

    # ---- bn2 affine + residual + relu ----
    if has_ds:
        scaled, shiftd = _bn_affine(stats1[:, c_pad:], p["gd"], p["bd"], npix, c_pad)
        out = _elementwise_call(
            _affine2_add_relu_kernel,
            [raw2, scale2, shift2, raw1, scaled, shiftd],
            [0, None, None, 1, None, None],      # raw1 column-block 1 = downsample conv
            tp, npix_pad, c_pad, jnp.float32)
    else:
        # stride == 1 and c_in == c_out here, so x itself is the identity shortcut.
        xid = jnp.pad(x.reshape(npix, c_in),
                      ((0, npix_pad - npix), (0, c_pad - c_in)))
        out = _elementwise_call(
            _affine_add_relu_kernel,
            [raw2, scale2, shift2, xid],
            [0, None, None, 0],
            tp, npix_pad, c_pad, jnp.float32)

    out = out[:npix, :c_out].reshape(n, ho, wo, c_out)
    return jnp.transpose(out, (0, 3, 1, 2))                           # back to NCHW


# ----------------------------- pure-JAX reference (for verification) -----------------------------

def _ref_bn(x_nhwc, g, b):
    m = jnp.mean(x_nhwc, axis=(0, 1, 2), keepdims=True)
    v = jnp.mean(jnp.square(x_nhwc - m), axis=(0, 1, 2), keepdims=True)
    return (x_nhwc - m) * jax.lax.rsqrt(v + _EPS) * g + b


def _ref_conv(x_nhwc, w_oihw, stride, pad):
    w_hwio = jnp.transpose(w_oihw, (2, 3, 1, 0))
    return jax.lax.conv_general_dilated(
        x_nhwc, w_hwio, (stride, stride), ((pad, pad), (pad, pad)),
        dimension_numbers=("NHWC", "HWIO", "NHWC"),
        precision=jax.lax.Precision.HIGHEST)


def basic_block_reference(x_nchw, p, stride=1):
    c_in = x_nchw.shape[1]
    c_out = p["w1"].shape[0]
    x = jnp.transpose(x_nchw, (0, 2, 3, 1)).astype(jnp.float32)
    out = jax.nn.relu(_ref_bn(_ref_conv(x, p["w1"], stride, 1), p["g1"], p["b1"]))
    out = _ref_bn(_ref_conv(out, p["w2"], 1, 1), p["g2"], p["b2"])
    if stride != 1 or c_in != c_out:
        ident = _ref_bn(_ref_conv(x, p["wd"], stride, 0), p["gd"], p["bd"])
    else:
        ident = x
    out = jax.nn.relu(out + ident)
    return jnp.transpose(out, (0, 3, 1, 2))


# ----------------------------- deterministic parameter init -----------------------------

def init_params(key, c_in, c_out):
    ks = jax.random.split(key, 9)
    return {
        "w1": 0.1 * jax.random.normal(ks[0], (c_out, c_in, 3, 3), jnp.float32),
        "g1": 1.0 + 0.1 * jax.random.normal(ks[1], (c_out,), jnp.float32),
        "b1": 0.1 * jax.random.normal(ks[2], (c_out,), jnp.float32),
        "w2": 0.1 * jax.random.normal(ks[3], (c_out, c_out, 3, 3), jnp.float32),
        "g2": 1.0 + 0.1 * jax.random.normal(ks[4], (c_out,), jnp.float32),
        "b2": 0.1 * jax.random.normal(ks[5], (c_out,), jnp.float32),
        # downsample params (used only when stride != 1 or c_in != c_out)
        "wd": 0.1 * jax.random.normal(ks[6], (c_out, c_in, 1, 1), jnp.float32),
        "gd": 1.0 + 0.1 * jax.random.normal(ks[7], (c_out,), jnp.float32),
        "bd": 0.1 * jax.random.normal(ks[8], (c_out,), jnp.float32),
    }


if __name__ == "__main__":
    key = jax.random.PRNGKey(0)
    kx, kx2, kp, kp2 = jax.random.split(key, 4)

    # Case 1: c_in != c_out, stride=2 -> fused 1x1-downsample branch, strided 3x3 conv.
    x = jax.random.normal(kx, (2, 4, 16, 16), jnp.float32)            # NCHW, like PyTorch
    p = init_params(kp, c_in=4, c_out=8)
    ref = basic_block_reference(x, p, stride=2)

    # f32 MXU path with a multi-tile grid (exercises cross-tile BN stat accumulation).
    out = jax.block_until_ready(
        basic_block_pallas(x, p, stride=2, compute_dtype=jnp.float32, tile_pixels=64))
    assert out.shape == (2, 8, 8, 8), out.shape
    err = float(jnp.max(jnp.abs(out - ref)))
    assert err < 3e-3, f"downsample f32 mismatch: max abs err = {err}"

    # Default bf16-MXU path (f32 accumulation).  Two batch-normalised 3x3 convs with bf16
    # operands give ~1e-2-level absolute error on unit-variance outputs; tolerance reflects that.
    outb = jax.block_until_ready(basic_block_pallas(x, p, stride=2))
    errb = float(jnp.max(jnp.abs(outb - ref)))
    assert errb < 1e-1, f"downsample bf16 mismatch: max abs err = {errb}"

    # Case 2: c_in == c_out, stride=1 -> identity shortcut.
    x2 = jax.random.normal(kx2, (2, 8, 16, 16), jnp.float32)
    p2 = init_params(kp2, c_in=8, c_out=8)
    ref2 = basic_block_reference(x2, p2, stride=1)

    out2 = jax.block_until_ready(
        basic_block_pallas(x2, p2, stride=1, compute_dtype=jnp.float32, tile_pixels=128))
    assert out2.shape == (2, 8, 16, 16), out2.shape
    err2 = float(jnp.max(jnp.abs(out2 - ref2)))
    assert err2 < 3e-3, f"identity f32 mismatch: max abs err = {err2}"

    out2b = jax.block_until_ready(basic_block_pallas(x2, p2, stride=1, tile_pixels=128))
    err2b = float(jnp.max(jnp.abs(out2b - ref2)))
    assert err2b < 1e-1, f"identity bf16 mismatch: max abs err = {err2b}"

    print("KERNEL_OK")
</pallas_src>

<mosaic_0001>
module attributes {stable_mosaic.version = 11 : i64} {
  func.func @_conv_stats_kernel(%arg0: i32, %arg1: memref<64x128xf32, #tpu.memory_space<vmem>>, %arg2: memref<128x256xf32, #tpu.memory_space<vmem>>, %arg3: memref<64x256xf32, #tpu.memory_space<vmem>>, %arg4: memref<2x256xf32, #tpu.memory_space<vmem>>) attributes {dimension_semantics = [#tpu.dimension_semantics<arbitrary>], iteration_bounds = array<i64: 2>, scalar_prefetch = 0 : i64, scratch_operands = 0 : i64, tpu.core_type = #tpu.core_type<tc>, window_params = [{transform_indices = @transform_0, window_bounds = array<i64: 64, 128>}, {pipeline_mode = #tpu.pipeline_mode<synchronous>, transform_indices = @transform_1, window_bounds = array<i64: 128, 256>}, {transform_indices = @transform_2, window_bounds = array<i64: 64, 256>}, {pipeline_mode = #tpu.pipeline_mode<synchronous>, transform_indices = @transform_3, window_bounds = array<i64: 2, 256>}]} {
    %c0_i32 = arith.constant 0 : i32
    %0 = arith.cmpi eq, %arg0, %c0_i32 : i32
    %1 = arith.extui %0 : i1 to i32
    %c0_i32_0 = arith.constant 0 : i32
    %2 = arith.cmpi ne, %1, %c0_i32_0 : i32
    scf.if %2 {
      %cst_12 = arith.constant 0.000000e+00 : f32
      %16 = vector.broadcast %cst_12 : f32 to vector<2x256xf32>
      %c0_13 = arith.constant 0 : index
      %c0_14 = arith.constant 0 : index
      %17 = vector.load %arg4[%c0_13, %c0_14] : memref<2x256xf32, #tpu.memory_space<vmem>>, vector<2x256xf32>
      tpu.vector_store %arg4[%c0_13, %c0_14], %16 {strides = array<i32>} : memref<2x256xf32, #tpu.memory_space<vmem>>, vector<2x256xf32>,
    } else {
    }
    %c0 = arith.constant 0 : index
    %c0_1 = arith.constant 0 : index
    %3 = vector.load %arg1[%c0, %c0_1] : memref<64x128xf32, #tpu.memory_space<vmem>>, vector<64x128xf32>
    %c0_2 = arith.constant 0 : index
    %c0_3 = arith.constant 0 : index
    %4 = vector.load %arg2[%c0_2, %c0_3] : memref<128x256xf32, #tpu.memory_space<vmem>>, vector<128x256xf32>
    %cst = arith.constant dense<0.000000e+00> : vector<64x256xf32>
    %5 = tpu.matmul %3, %4, %cst {dimension_numbers = #tpu.dot_dimension_numbers<[1], [0], [0], [1], [0, 0, 1, 1], [], []>} : vector<64x128xf32>, vector<128x256xf32>, vector<64x256xf32> -> vector<64x256xf32>
    %c0_4 = arith.constant 0 : index
    %c0_5 = arith.constant 0 : index
    %6 = vector.load %arg3[%c0_4, %c0_5] : memref<64x256xf32, #tpu.memory_space<vmem>>, vector<64x256xf32>
    tpu.vector_store %arg3[%c0_4, %c0_5], %5 {strides = array<i32>} : memref<64x256xf32, #tpu.memory_space<vmem>>, vector<64x256xf32>,
    %c0_6 = arith.constant 0 : index
    %c0_7 = arith.constant 0 : index
    %7 = vector.load %arg4[%c0_6, %c0_7] : memref<2x256xf32, #tpu.memory_space<vmem>>, vector<2x256xf32>
    %cst_8 = arith.constant dense<0.000000e+00> : vector<256xf32>
    %8 = vector.multi_reduction <add>, %5, %cst_8 [0] : vector<64x256xf32> to vector<256xf32>
    %9 = vector.shape_cast %8 : vector<256xf32> to vector<1x256xf32>
    %10 = arith.mulf %5, %5 : vector<64x256xf32>
    %cst_9 = arith.constant dense<0.000000e+00> : vector<256xf32>
    %11 = vector.multi_reduction <add>, %10, %cst_9 [0] : vector<64x256xf32> to vector<256xf32>
    %12 = vector.shape_cast %11 : vector<256xf32> to vector<1x256xf32>
    %13 = tpu.concatenate %9, %12 in 0 : vector<1x256xf32>, vector<1x256xf32> -> vector<2x256xf32>
    %14 = arith.addf %7, %13 : vector<2x256xf32>
    %c0_10 = arith.constant 0 : index
    %c0_11 = arith.constant 0 : index
    %15 = vector.load %arg4[%c0_10, %c0_11] : memref<2x256xf32, #tpu.memory_space<vmem>>, vector<2x256xf32>
    tpu.vector_store %arg4[%c0_10, %c0_11], %14 {strides = array<i32>} : memref<2x256xf32, #tpu.memory_space<vmem>>, vector<2x256xf32>,
    return
  }
  func.func @transform_0(%arg0: i32) -> (i32, i32) {
    %c0_i32 = arith.constant 0 : i32
    %c0_i32_0 = arith.constant 0 : i32
    return %arg0, %c0_i32 : i32, i32
  }
  func.func @transform_1(%arg0: i32) -> (i32, i32) {
    %c0_i32 = arith.constant 0 : i32
    %c0_i32_0 = arith.constant 0 : i32
    %c0_i32_1 = arith.constant 0 : i32
    return %c0_i32, %c0_i32_0 : i32, i32
  }
  func.func @transform_2(%arg0: i32) -> (i32, i32) {
    %c0_i32 = arith.constant 0 : i32
    %c0_i32_0 = arith.constant 0 : i32
    return %arg0, %c0_i32 : i32, i32
  }
  func.func @transform_3(%arg0: i32) -> (i32, i32) {
    %c0_i32 = arith.constant 0 : i32
    %c0_i32_0 = arith.constant 0 : i32
    %c0_i32_1 = arith.constant 0 : i32
    return %c0_i32, %c0_i32_0 : i32, i32
  }
}

module attributes {stable_mosaic.version = 11 : i64} {
  func.func @_affine_relu_kernel(%arg0: i32, %arg1: memref<64x128xf32, #tpu.memory_space<vmem>>, %arg2: memref<1x128xf32, #tpu.memory_space<vmem>>, %arg3: memref<1x128xf32, #tpu.memory_space<vmem>>, %arg4: memref<64x128xf32, #tpu.memory_space<vmem>>) attributes {dimension_semantics = [#tpu.dimension_semantics<parallel>], iteration_bounds = array<i64: 2>, scalar_prefetch = 0 : i64, scratch_operands = 0 : i64, tpu.core_type = #tpu.core_type<tc>, window_params = [{transform_indices = @transform_0, window_bounds = array<i64: 64, 128>}, {pipeline_mode = #tpu.pipeline_mode<synchronous>, transform_indices = @transform_1, window_bounds = array<i64: 1, 128>}, {pipeline_mode = #tpu.pipeline_mode<synchronous>, transform_indices = @transform_2, window_bounds = array<i64: 1, 128>}, {transform_indices = @transform_3, window_bounds = array<i64: 64, 128>}]} {
    %c0 = arith.constant 0 : index
    %c0_0 = arith.constant 0 : index
    %0 = vector.load %arg1[%c0, %c0_0] : memref<64x128xf32, #tpu.memory_space<vmem>>, vector<64x128xf32>
    %c0_1 = arith.constant 0 : index
    %c0_2 = arith.constant 0 : index
    %1 = vector.load %arg2[%c0_1, %c0_2] : memref<1x128xf32, #tpu.memory_space<vmem>>, vector<1x128xf32>
    %2 = vector.broadcast %1 : vector<1x128xf32> to vector<64x128xf32>
    %3 = arith.mulf %0, %2 : vector<64x128xf32>
    %c0_3 = arith.constant 0 : index
    %c0_4 = arith.constant 0 : index
    %4 = vector.load %arg3[%c0_3, %c0_4] : memref<1x128xf32, #tpu.memory_space<vmem>>, vector<1x128xf32>
    %5 = vector.broadcast %4 : vector<1x128xf32> to vector<64x128xf32>
    %6 = arith.addf %3, %5 : vector<64x128xf32>
    %cst = arith.constant 0.000000e+00 : f32
    %7 = vector.broadcast %cst : f32 to vector<64x128xf32>
    %8 = arith.maximumf %6, %7 : vector<64x128xf32>
    %c0_5 = arith.constant 0 : index
    %c0_6 = arith.constant 0 : index
    %9 = vector.load %arg4[%c0_5, %c0_6] : memref<64x128xf32, #tpu.memory_space<vmem>>, vector<64x128xf32>
    tpu.vector_store %arg4[%c0_5, %c0_6], %8 {strides = array<i32>} : memref<64x128xf32, #tpu.memory_space<vmem>>, vector<64x128xf32>,
    return
  }
  func.func @transform_0(%arg0: i32) -> (i32, i32) {
    %c0_i32 = arith.constant 0 : i32
    %c0_i32_0 = arith.constant 0 : i32
    return %arg0, %c0_i32 : i32, i32
  }
  func.func @transform_1(%arg0: i32) -> (i32, i32) {
    %c0_i32 = arith.constant 0 : i32
    %c0_i32_0 = arith.constant 0 : i32
    %c0_i32_1 = arith.constant 0 : i32
    return %c0_i32, %c0_i32_0 : i32, i32
  }
  func.func @transform_2(%arg0: i32) -> (i32, i32) {
    %c0_i32 = arith.constant 0 : i32
    %c0_i32_0 = arith.constant 0 : i32
    %c0_i32_1 = arith.constant 0 : i32
    return %c0_i32, %c0_i32_0 : i32, i32
  }
  func.func @transform_3(%arg0: i32) -> (i32, i32) {
    %c0_i32 = arith.constant 0 : i32
    %c0_i32_0 = arith.constant 0 : i32
    return %arg0, %c0_i32 : i32, i32
  }
}

module attributes {stable_mosaic.version = 11 : i64} {
  func.func @_conv_stats_kernel(%arg0: i32, %arg1: memref<64x128xf32, #tpu.memory_space<vmem>>, %arg2: memref<128x128xf32, #tpu.memory_space<vmem>>, %arg3: memref<64x128xf32, #tpu.memory_space<vmem>>, %arg4: memref<2x128xf32, #tpu.memory_space<vmem>>) attributes {dimension_semantics = [#tpu.dimension_semantics<arbitrary>], iteration_bounds = array<i64: 2>, scalar_prefetch = 0 : i64, scratch_operands = 0 : i64, tpu.core_type = #tpu.core_type<tc>, window_params = [{transform_indices = @transform_0, window_bounds = array<i64: 64, 128>}, {pipeline_mode = #tpu.pipeline_mode<synchronous>, transform_indices = @transform_1, window_bounds = array<i64: 128, 128>}, {transform_indices = @transform_2, window_bounds = array<i64: 64, 128>}, {pipeline_mode = #tpu.pipeline_mode<synchronous>, transform_indices = @transform_3, window_bounds = array<i64: 2, 128>}]} {
    %c0_i32 = arith.constant 0 : i32
    %0 = arith.cmpi eq, %arg0, %c0_i32 : i32
    %1 = arith.extui %0 : i1 to i32
    %c0_i32_0 = arith.constant 0 : i32
    %2 = arith.cmpi ne, %1, %c0_i32_0 : i32
    scf.if %2 {
      %cst_12 = arith.constant 0.000000e+00 : f32
      %16 = vector.broadcast %cst_12 : f32 to vector<2x128xf32>
      %c0_13 = arith.constant 0 : index
      %c0_14 = arith.constant 0 : index
      %17 = vector.load %arg4[%c0_13, %c0_14] : memref<2x128xf32, #tpu.memory_space<vmem>>, vector<2x128xf32>
      tpu.vector_store %arg4[%c0_13, %c0_14], %16 {strides = array<i32>} : memref<2x128xf32, #tpu.memory_space<vmem>>, vector<2x128xf32>,
    } else {
    }
    %c0 = arith.constant 0 : index
    %c0_1 = arith.constant 0 : index
    %3 = vector.load %arg1[%c0, %c0_1] : memref<64x128xf32, #tpu.memory_space<vmem>>, vector<64x128xf32>
    %c0_2 = arith.constant 0 : index
    %c0_3 = arith.constant 0 : index
    %4 = vector.load %arg2[%c0_2, %c0_3] : memref<128x128xf32, #tpu.memory_space<vmem>>, vector<128x128xf32>
    %cst = arith.constant dense<0.000000e+00> : vector<64x128xf32>
    %5 = tpu.matmul %3, %4, %cst {dimension_numbers = #tpu.dot_dimension_numbers<[1], [0], [0], [1], [0, 0, 1, 1], [], []>} : vector<64x128xf32>, vector<128x128xf32>, vector<64x128xf32> -> vector<64x128xf32>
    %c0_4 = arith.constant 0 : index
    %c0_5 = arith.constant 0 : index
    %6 = vector.load %arg3[%c0_4, %c0_5] : memref<64x128xf32, #tpu.memory_space<vmem>>, vector<64x128xf32>
    tpu.vector_store %arg3[%c0_4, %c0_5], %5 {strides = array<i32>} : memref<64x128xf32, #tpu.memory_space<vmem>>, vector<64x128xf32>,
    %c0_6 = arith.constant 0 : index
    %c0_7 = arith.constant 0 : index
    %7 = vector.load %arg4[%c0_6, %c0_7] : memref<2x128xf32, #tpu.memory_space<vmem>>, vector<2x128xf32>
    %cst_8 = arith.constant dense<0.000000e+00> : vector<128xf32>
    %8 = vector.multi_reduction <add>, %5, %cst_8 [0] : vector<64x128xf32> to vector<128xf32>
    %9 = vector.shape_cast %8 : vector<128xf32> to vector<1x128xf32>
    %10 = arith.mulf %5, %5 : vector<64x128xf32>
    %cst_9 = arith.constant dense<0.000000e+00> : vector<128xf32>
    %11 = vector.multi_reduction <add>, %10, %cst_9 [0] : vector<64x128xf32> to vector<128xf32>
    %12 = vector.shape_cast %11 : vector<128xf32> to vector<1x128xf32>
    %13 = tpu.concatenate %9, %12 in 0 : vector<1x128xf32>, vector<1x128xf32> -> vector<2x128xf32>
    %14 = arith.addf %7, %13 : vector<2x128xf32>
    %c0_10 = arith.constant 0 : index
    %c0_11 = arith.constant 0 : index
    %15 = vector.load %arg4[%c0_10, %c0_11] : memref<2x128xf32, #tpu.memory_space<vmem>>, vector<2x128xf32>
    tpu.vector_store %arg4[%c0_10, %c0_11], %14 {strides = array<i32>} : memref<2x128xf32, #tpu.memory_space<vmem>>, vector<2x128xf32>,
    return
  }
  func.func @transform_0(%arg0: i32) -> (i32, i32) {
    %c0_i32 = arith.constant 0 : i32
    %c0_i32_0 = arith.constant 0 : i32
    return %arg0, %c0_i32 : i32, i32
  }
  func.func @transform_1(%arg0: i32) -> (i32, i32) {
    %c0_i32 = arith.constant 0 : i32
    %c0_i32_0 = arith.constant 0 : i32
    %c0_i32_1 = arith.constant 0 : i32
    return %c0_i32, %c0_i32_0 : i32, i32
  }
  func.func @transform_2(%arg0: i32) -> (i32, i32) {
    %c0_i32 = arith.constant 0 : i32
    %c0_i32_0 = arith.constant 0 : i32
    return %arg0, %c0_i32 : i32, i32
  }
  func.func @transform_3(%arg0: i32) -> (i32, i32) {
    %c0_i32 = arith.constant 0 : i32
    %c0_i32_0 = arith.constant 0 : i32
    %c0_i32_1 = arith.constant 0 : i32
    return %c0_i32, %c0_i32_0 : i32, i32
  }
}

module attributes {stable_mosaic.version = 11 : i64} {
  func.func @_affine2_add_relu_kernel(%arg0: i32, %arg1: memref<64x128xf32, #tpu.memory_space<vmem>>, %arg2: memref<1x128xf32, #tpu.memory_space<vmem>>, %arg3: memref<1x128xf32, #tpu.memory_space<vmem>>, %arg4: memref<64x128xf32, #tpu.memory_space<vmem>>, %arg5: memref<1x128xf32, #tpu.memory_space<vmem>>, %arg6: memref<1x128xf32, #tpu.memory_space<vmem>>, %arg7: memref<64x128xf32, #tpu.memory_space<vmem>>) attributes {dimension_semantics = [#tpu.dimension_semantics<parallel>], iteration_bounds = array<i64: 2>, scalar_prefetch = 0 : i64, scratch_operands = 0 : i64, tpu.core_type = #tpu.core_type<tc>, window_params = [{transform_indices = @transform_0, window_bounds = array<i64: 64, 128>}, {pipeline_mode = #tpu.pipeline_mode<synchronous>, transform_indices = @transform_1, window_bounds = array<i64: 1, 128>}, {pipeline_mode = #tpu.pipeline_mode<synchronous>, transform_indices = @transform_2, window_bounds = array<i64: 1, 128>}, {transform_indices = @transform_3, window_bounds = array<i64: 64, 128>}, {pipeline_mode = #tpu.pipeline_mode<synchronous>, transform_indices = @transform_4, window_bounds = array<i64: 1, 128>}, {pipeline_mode = #tpu.pipeline_mode<synchronous>, transform_indices = @transform_5, window_bounds = array<i64: 1, 128>}, {transform_indices = @transform_6, window_bounds = array<i64: 64, 128>}]} {
    %c0 = arith.constant 0 : index
    %c0_0 = arith.constant 0 : index
    %0 = vector.load %arg1[%c0, %c0_0] : memref<64x128xf32, #tpu.memory_space<vmem>>, vector<64x128xf32>
    %c0_1 = arith.constant 0 : index
    %c0_2 = arith.constant 0 : index
    %1 = vector.load %arg2[%c0_1, %c0_2] : memref<1x128xf32, #tpu.memory_space<vmem>>, vector<1x128xf32>
    %2 = vector.broadcast %1 : vector<1x128xf32> to vector<64x128xf32>
    %3 = arith.mulf %0, %2 : vector<64x128xf32>
    %c0_3 = arith.constant 0 : index
    %c0_4 = arith.constant 0 : index
    %4 = vector.load %arg3[%c0_3, %c0_4] : memref<1x128xf32, #tpu.memory_space<vmem>>, vector<1x128xf32>
    %5 = vector.broadcast %4 : vector<1x128xf32> to vector<64x128xf32>
    %6 = arith.addf %3, %5 : vector<64x128xf32>
    %c0_5 = arith.constant 0 : index
    %c0_6 = arith.constant 0 : index
    %7 = vector.load %arg4[%c0_5, %c0_6] : memref<64x128xf32, #tpu.memory_space<vmem>>, vector<64x128xf32>
    %c0_7 = arith.constant 0 : index
    %c0_8 = arith.constant 0 : index
    %8 = vector.load %arg5[%c0_7, %c0_8] : memref<1x128xf32, #tpu.memory_space<vmem>>, vector<1x128xf32>
    %9 = vector.broadcast %8 : vector<1x128xf32> to vector<64x128xf32>
    %10 = arith.mulf %7, %9 : vector<64x128xf32>
    %11 = arith.addf %6, %10 : vector<64x128xf32>
    %c0_9 = arith.constant 0 : index
    %c0_10 = arith.constant 0 : index
    %12 = vector.load %arg6[%c0_9, %c0_10] : memref<1x128xf32, #tpu.memory_space<vmem>>, vector<1x128xf32>
    %13 = vector.broadcast %12 : vector<1x128xf32> to vector<64x128xf32>
    %14 = arith.addf %11, %13 : vector<64x128xf32>
    %cst = arith.constant 0.000000e+00 : f32
    %15 = vector.broadcast %cst : f32 to vector<64x128xf32>
    %16 = arith.maximumf %14, %15 : vector<64x128xf32>
    %c0_11 = arith.constant 0 : index
    %c0_12 = arith.constant 0 : index
    %17 = vector.load %arg7[%c0_11, %c0_12] : memref<64x128xf32, #tpu.memory_space<vmem>>, vector<64x128xf32>
    tpu.vector_store %arg7[%c0_11, %c0_12], %16 {strides = array<i32>} : memref<64x128xf32, #tpu.memory_space<vmem>>, vector<64x128xf32>,
    return
  }
  func.func @transform_0(%arg0: i32) -> (i32, i32) {
    %c0_i32 = arith.constant 0 : i32
    %c0_i32_0 = arith.constant 0 : i32
    return %arg0, %c0_i32 : i32, i32
  }
  func.func @transform_1(%arg0: i32) -> (i32, i32) {
    %c0_i32 = arith.constant 0 : i32
    %c0_i32_0 = arith.constant 0 : i32
    %c0_i32_1 = arith.constant 0 : i32
    return %c0_i32, %c0_i32_0 : i32, i32
  }
  func.func @transform_2(%arg0: i32) -> (i32, i32) {
    %c0_i32 = arith.constant 0 : i32
    %c0_i32_0 = arith.constant 0 : i32
    %c0_i32_1 = arith.constant 0 : i32
    return %c0_i32, %c0_i32_0 : i32, i32
  }
  func.func @transform_3(%arg0: i32) -> (i32, i32) {
    %c1_i32 = arith.constant 1 : i32
    %c0_i32 = arith.constant 0 : i32
    return %arg0, %c1_i32 : i32, i32
  }
  func.func @transform_4(%arg0: i32) -> (i32, i32) {
    %c0_i32 = arith.constant 0 : i32
    %c0_i32_0 = arith.constant 0 : i32
    %c0_i32_1 = arith.constant 0 : i32
    return %c0_i32, %c0_i32_0 : i32, i32
  }
  func.func @transform_5(%arg0: i32) -> (i32, i32) {
    %c0_i32 = arith.constant 0 : i32
    %c0_i32_0 = arith.constant 0 : i32
    %c0_i32_1 = arith.constant 0 : i32
    return %c0_i32, %c0_i32_0 : i32, i32
  }
  func.func @transform_6(%arg0: i32) -> (i32, i32) {
    %c0_i32 = arith.constant 0 : i32
    %c0_i32_0 = arith.constant 0 : i32
    return %arg0, %c0_i32 : i32, i32
  }
}

</mosaic_0001>

<llo_original>
// kernel: basic_block_pallas.5
$region0: #{basic_block_pallas.5}
  #allocation0 [shape = 'u32[]', space=smem, size = 0x4, offset = 0x4, fixed_abs, tag = 'smem constant byte address 0x4 - core index']
  #allocation1 [shape = 'u32[144,128]{1,0:T(1,128)}', space=vmem, size = 0x12000, scoped, tag = 'internal scratch']
  %s0 = inlined_call_operand.vmem [shape: f32[128,256], index: 0, kind: input, shape index: {}]
  %s1 = inlined_call_operand.vmem [shape: f32[1,128], index: 1, kind: input, shape index: {}]
  %s2 = inlined_call_operand.vmem [shape: f32[1,128], index: 2, kind: input, shape index: {}]
  %s3 = inlined_call_operand.vmem [shape: f32[128,128], index: 3, kind: output, shape index: {}]
  %s4 = sld [smem:[#allocation0]]
  $region83: #{basic_block_pallas.5} parent=0
    _
  %s6 = ssub.s32 1, %s4
  %s7 = scalar_select 0, %s6, %s4
  $region1: #{basic_block_pallas.5} parent=0
    #allocation2 [shape = 'u8[65536]{0}', space=vmem, size = 0x10000, scoped, tag = 'input window, operand 0']
    loop: start=0, step=1, limit=4
    $region2: #{basic_block_pallas.5} parent=1 // loop_pre_header
      _
    $region3: #{basic_block_pallas.5} parent=1 // loop_header
      %s9 = sphi 0, %s13
      %p10 = scmp.ge.s32.totalorder %s9, 4
      %s19 = sphi 0, %s21
      %s22 = sphi 0, %s19
      %s23 = sphi 0, %s22
      %s39 = sphi 0, %s23
      %s43 = sphi 0, %s43
      %s45 = sphi 0, %s43
      %s46 = sphi 0, %s45
      %s60 = sphi 0, %s46
      %s64 = sphi 0, %s64
      %s66 = sphi 0, %s64
      %s67 = sphi 0, %s66
      %s81 = sphi 0, %s67
      %s87 = sphi 0, %s89
      %s90 = sphi 0, %s87
      %s91 = sphi 0, %s90
      %s107 = sphi 0, %s91
    $region4: #{basic_block_pallas.5} parent=1 // loop_header_branch
      %12 = sbr.rel (%p10) target = $region8
    $region5: #{basic_block_pallas.5} parent=1 // loop_body
      %s14 = ssub.s32 %s9, 1
      %s15 = ssub.s32 %s9, 2
      %s16 = sadd.s32 %s9, 1
      %s17 = ssub.s32 %s9, %s16
      %p18 = scmp.eq.s32.totalorder %s17, 0
      %s20 = sadd.s32 %s19, 1
      %s21 = scalar_select %p18, %s19, %s20
      %p24 = pneg %p18
      %p25 = scmp.eq.s32.totalorder %s9, 1
      %p26 = por %p24, %p25
      %p27 = scmp.ne.s32.totalorder %s19, %s22
      %p28 = scmp.eq.s32.totalorder %s9, 0
      %p29 = por %p27, %p28
      %p30 = scmp.ne.s32.totalorder %s19, %s22
      %p31 = scmp.eq.s32.totalorder %s14, 1
      %p32 = por %p30, %p31
      %p33 = scmp.ne.s32.totalorder %s22, %s23
      %p34 = scmp.eq.s32.totalorder %s14, 0
      %p35 = por %p33, %p34
      %p36 = scmp.ne.s32.totalorder %s22, %s23
      %p37 = scmp.eq.s32.totalorder %s15, 1
      %p38 = por %p36, %p37
      %p40 = scmp.ne.s32.totalorder %s23, %s39
      %p41 = scmp.eq.s32.totalorder %s15, 0
      %p42 = por %p40, %p41
      %s44 = sadd.s32 %s43, 1
      %p47 = scmp.eq.s32.totalorder %s9, 1
      %p48 = scmp.ne.s32.totalorder %s43, %s45
      %p49 = scmp.eq.s32.totalorder %s9, 0
      %p50 = por %p48, %p49
      %p51 = scmp.ne.s32.totalorder %s43, %s45
      %p52 = scmp.eq.s32.totalorder %s14, 1
      %p53 = por %p51, %p52
      %p54 = scmp.ne.s32.totalorder %s45, %s46
      %p55 = scmp.eq.s32.totalorder %s14, 0
      %p56 = por %p54, %p55
      %p57 = scmp.ne.s32.totalorder %s45, %s46
      %p58 = scmp.eq.s32.totalorder %s15, 1
      %p59 = por %p57, %p58
      %p61 = scmp.ne.s32.totalorder %s46, %s60
      %p62 = scmp.eq.s32.totalorder %s15, 0
      %p63 = por %p61, %p62
      %s65 = sadd.s32 %s64, 1
      %p68 = scmp.eq.s32.totalorder %s9, 1
      %p69 = scmp.ne.s32.totalorder %s64, %s66
      %p70 = scmp.eq.s32.totalorder %s9, 0
      %p71 = por %p69, %p70
      %p72 = scmp.ne.s32.totalorder %s64, %s66
      %p73 = scmp.eq.s32.totalorder %s14, 1
      %p74 = por %p72, %p73
      %p75 = scmp.ne.s32.totalorder %s66, %s67
      %p76 = scmp.eq.s32.totalorder %s14, 0
      %p77 = por %p75, %p76
      %p78 = scmp.ne.s32.totalorder %s66, %s67
      %p79 = scmp.eq.s32.totalorder %s15, 1
      %p80 = por %p78, %p79
      %p82 = scmp.ne.s32.totalorder %s67, %s81
      %p83 = scmp.eq.s32.totalorder %s15, 0
      %p84 = por %p82, %p83
      %s85 = ssub.s32 %s9, %s16
      %p86 = scmp.eq.s32.totalorder %s85, 0
      %s88 = sadd.s32 %s87, 1
      %s89 = scalar_select %p86, %s87, %s88
      %p92 = pneg %p86
      %p93 = scmp.eq.s32.totalorder %s9, 1
      %p94 = por %p92, %p93
      %p95 = scmp.ne.s32.totalorder %s87, %s90
      %p96 = scmp.eq.s32.totalorder %s9, 0
      %p97 = por %p95, %p96
      %p98 = scmp.ne.s32.totalorder %s87, %s90
      %p99 = scmp.eq.s32.totalorder %s14, 1
      %p100 = por %p98, %p99
      %p101 = scmp.ne.s32.totalorder %s90, %s91
      %p102 = scmp.eq.s32.totalorder %s14, 0
      %p103 = por %p101, %p102
      %p104 = scmp.ne.s32.totalorder %s90, %s91
      %p105 = scmp.eq.s32.totalorder %s15, 1
      %p106 = por %p104, %p105
      %p108 = scmp.ne.s32.totalorder %s91, %s107
      %p109 = scmp.eq.s32.totalorder %s15, 0
      %p110 = por %p108, %p109
      %p111 = scmp.le.s32.totalorder 1, %s9
      %p112 = scmp.lt.s32.totalorder %s9, 3
      %p113 = pnand %p111, %p112
      %p114 = pneg %p113
      // Predicated region
      $region9: #{basic_block_pallas.5} parent=5 // pred_check
        _
      $region10: #{basic_block_pallas.5} parent=5 // pred_check_branch
        %116 = sbr.rel (%p113) target = $region12
      $region11: #{basic_block_pallas.5} parent=5 // pred_region
        %s117 = ssub.s32 %s9, 1
        // Predicated region
        $region13: #{basic_block_pallas.5} parent=11 // pred_check
          %p118 = pneg %p56
        $region14: #{basic_block_pallas.5} parent=11 // pred_check_branch
          %120 = sbr.rel (%p118) target = $region16
        $region15: #{basic_block_pallas.5} parent=11 // pred_region
          _
        $region16: #{basic_block_pallas.5} parent=11 // pred_fallthru
          _
        // Predicated region
        $region17: #{basic_block_pallas.5} parent=11 // pred_check
          %p121 = pneg %p77
        $region18: #{basic_block_pallas.5} parent=11 // pred_check_branch
          %123 = sbr.rel (%p121) target = $region20
        $region19: #{basic_block_pallas.5} parent=11 // pred_region
          _
        $region20: #{basic_block_pallas.5} parent=11 // pred_fallthru
          _
      $region12: #{basic_block_pallas.5} parent=5 // pred_fallthru
        _
      %p124 = scmp.lt.s32.totalorder %s9, 2
      // Predicated region
      $region21: #{basic_block_pallas.5} parent=5 // pred_check
        %p125 = pneg %p124
      $region22: #{basic_block_pallas.5} parent=5 // pred_check_branch
        %127 = sbr.rel (%p125) target = $region24
      $region23: #{basic_block_pallas.5} parent=5 // pred_region
        // Predicated region
        $region25: #{basic_block_pallas.5} parent=23 // pred_check
          %p128 = pneg %p29
        $region26: #{basic_block_pallas.5} parent=23 // pred_check_branch
          %130 = sbr.rel (%p128) target = $region28
        $region27: #{basic_block_pallas.5} parent=23 // pred_region
          %s131 = sand.u32 %s19, 1
          %s132 = sand.u32 %s19, 1
          %s133 = smul.addr %s132, 64
          %s134 = scalar_lea.vmem [#allocation2], %s133
          %s135 = smul.u32 8, %s9
          %s136 = smul.addr %s135, 2
          %s137 = smul.addr %s136, 8
          %s138 = scalar_lea.vmem %s0, %s137
          // Predicated region
          $region29: #{basic_block_pallas.5} parent=27 // pred_check
            _
          $region30: #{basic_block_pallas.5} parent=27 // pred_check_branch
            %140 = sbr.rel (0) target = $region32
          $region31: #{basic_block_pallas.5} parent=27 // pred_region
            // Predicated region
            $region33: #{basic_block_pallas.5} parent=31 // pred_check
              _
            $region34: #{basic_block_pallas.5} parent=31 // pred_check_branch
              %142 = sbr.rel (0) target = $region36
            $region35: #{basic_block_pallas.5} parent=31 // pred_region
              // Predicated region
              $region48: #{basic_block_pallas.5} parent=35 // pred_check
                _
              $region49: #{basic_block_pallas.5} parent=35 // pred_check_branch
                %172 = sbr.rel (0) target = $region51
              $region50: #{basic_block_pallas.5} parent=35 // pred_region
                loop: start=0, step=1, limit=1
                $region52: #{basic_block_pallas.5} parent=50 // loop_pre_header
                  _
                $region53: #{basic_block_pallas.5} parent=50 // loop_header
                  %s174 = sphi 0, %s178
                  %p175 = scmp.ge.s32.totalorder %s174, 1
                  %s179 = sphi %s138, %s138
                  %s180 = sphi %s134, %s134
                $region54: #{basic_block_pallas.5} parent=50 // loop_header_branch
                  %177 = sbr.rel (%p175) target = $region58
                $region55: #{basic_block_pallas.5} parent=50 // loop_body
                  %v181 = vld [vmem:[%s179] sm:$0xff]
                  %182 = vst [vmem:[%s180] sm:$0xff] %v181
                  %v183 = vld [vmem:[%s179 + $0x10] sm:$0xff]
                  %184 = vst [vmem:[%s180 + $0x8] sm:$0xff] %v183
                  %v185 = vld [vmem:[%s179 + $0x20] sm:$0xff]
                  %186 = vst [vmem:[%s180 + $0x10] sm:$0xff] %v185
                  %v187 = vld [vmem:[%s179 + $0x30] sm:$0xff]
                  %188 = vst [vmem:[%s180 + $0x18] sm:$0xff] %v187
                  %v189 = vld [vmem:[%s179 + $0x40] sm:$0xff]
                  %190 = vst [vmem:[%s180 + $0x20] sm:$0xff] %v189
                  %v191 = vld [vmem:[%s179 + $0x50] sm:$0xff]
                  %192 = vst [vmem:[%s180 + $0x28] sm:$0xff] %v191
                  %v193 = vld [vmem:[%s179 + $0x60] sm:$0xff]
                  %194 = vst [vmem:[%s180 + $0x30] sm:$0xff] %v193
                  %v195 = vld [vmem:[%s179 + $0x70] sm:$0xff]
                  %196 = vst [vmem:[%s180 + $0x38] sm:$0xff] %v195
                $region56: #{basic_block_pallas.5} parent=50 // loop_footer
                  %s178 = sadd.s32 1, %s174
                $region57: #{basic_block_pallas.5} parent=50 // loop_footer_branch
                  %173 = sbr.rel target = $region53
                $region58: #{basic_block_pallas.5} parent=50 // loop_exit
                  _
              $region51: #{basic_block_pallas.5} parent=35 // pred_fallthru
                _
              // Predicated region
              $region59: #{basic_block_pallas.5} parent=35 // pred_check
                _
              $region60: #{basic_block_pallas.5} parent=35 // pred_check_branch
                %198 = sbr.rel target = $region62
              $region61: #{basic_block_pallas.5} parent=35 // pred_region
                _
              $region62: #{basic_block_pallas.5} parent=35 // pred_fallthru
                _
            $region36: #{basic_block_pallas.5} parent=31 // pred_fallthru
              _
            // Predicated region
            $region37: #{basic_block_pallas.5} parent=31 // pred_check
              _
            $region38: #{basic_block_pallas.5} parent=31 // pred_check_branch
              %144 = sbr.rel target = $region40
            $region39: #{basic_block_pallas.5} parent=31 // pred_region
              %s146 = ssub.s32 256, 1
              loop: start=0, step=1, limit=1
              $region41: #{basic_block_pallas.5} parent=39 // loop_pre_header
                _
              $region42: #{basic_block_pallas.5} parent=39 // loop_header
                %s148 = sphi 0, %s152
                %p149 = scmp.ge.s32.totalorder %s148, 1
                %s153 = sphi %s138, %s138
                %s154 = sphi %s134, %s134
              $region43: #{basic_block_pallas.5} parent=39 // loop_header_branch
                %151 = sbr.rel (%p149) target = $region47
              $region44: #{basic_block_pallas.5} parent=39 // loop_body
                %v155 = vld [vmem:[%s153] sm:%s146]
                %156 = vst [vmem:[%s154] sm:%s146] %v155
                %v157 = vld [vmem:[%s153 + $0x10] sm:%s146]
                %158 = vst [vmem:[%s154 + $0x8] sm:%s146] %v157
                %v159 = vld [vmem:[%s153 + $0x20] sm:%s146]
                %160 = vst [vmem:[%s154 + $0x10] sm:%s146] %v159
                %v161 = vld [vmem:[%s153 + $0x30] sm:%s146]
                %162 = vst [vmem:[%s154 + $0x18] sm:%s146] %v161
                %v163 = vld [vmem:[%s153 + $0x40] sm:%s146]
                %164 = vst [vmem:[%s154 + $0x20] sm:%s146] %v163
                %v165 = vld [vmem:[%s153 + $0x50] sm:%s146]
                %166 = vst [vmem:[%s154 + $0x28] sm:%s146] %v165
                %v167 = vld [vmem:[%s153 + $0x60] sm:%s146]
                %168 = vst [vmem:[%s154 + $0x30] sm:%s146] %v167
                %v169 = vld [vmem:[%s153 + $0x70] sm:%s146]
                %170 = vst [vmem:[%s154 + $0x38] sm:%s146] %v169
              $region45: #{basic_block_pallas.5} parent=39 // loop_footer
                %s152 = sadd.s32 1, %s148
              $region46: #{basic_block_pallas.5} parent=39 // loop_footer_branch
                %147 = sbr.rel target = $region42
              $region47: #{basic_block_pallas.5} parent=39 // loop_exit
                _
            $region40: #{basic_block_pallas.5} parent=31 // pred_fallthru
              _
          $region32: #{basic_block_pallas.5} parent=27 // pred_fallthru
            _
          %199 = vnop
        $region28: #{basic_block_pallas.5} parent=23 // pred_fallthru
          _
      $region24: #{basic_block_pallas.5} parent=5 // pred_fallthru
        _
      %p200 = scmp.le.s32.totalorder 1, %s9
      %p201 = scmp.lt.s32.totalorder %s9, 3
      %p202 = pnand %p200, %p201
      %p203 = pneg %p202
      // Predicated region
      $region63: #{basic_block_pallas.5} parent=5 // pred_check
        _
      $region64: #{basic_block_pallas.5} parent=5 // pred_check_branch
        %205 = sbr.rel (%p202) target = $region66
      $region65: #{basic_block_pallas.5} parent=5 // pred_region
        %s206 = ssub.s32 %s9, 1
        %s207 = sand.u32 %s22, 1
        %s208 = sand.u32 %s22, 1
        %s209 = smul.addr %s208, 64
        %s210 = scalar_lea.vmem [#allocation2], %s209
        // Predicated region
        $region67: #{basic_block_pallas.5} parent=65 // pred_check
          %p211 = pneg %p35
        $region68: #{basic_block_pallas.5} parent=65 // pred_check_branch
          %213 = sbr.rel (%p211) target = $region70
        $region69: #{basic_block_pallas.5} parent=65 // pred_region
          _
        $region70: #{basic_block_pallas.5} parent=65 // pred_fallthru
          _
        %s214 = sand.u32 %s22, 1
        %s215 = sand.u32 %s22, 1
        %s216 = smul.addr %s215, 64
        %s217 = scalar_lea.vmem [#allocation2], %s216
        %p218 = pneg %p35
        %p219 = pneg %p32
        %p220 = pneg %p56
        %p221 = pneg %p53
        %p222 = pneg %p77
        %p223 = pneg %p74
        %p224 = pneg %p103
        %p225 = pneg %p100
        %s226 = smul.u32 8, %s14
        %p227 = scmp.lt.s32.totalorder %s226, 15
        %s228 = scalar_select %p227, %s226, 15
        %s229 = smul.addr %s228, 8
        %s230 = scalar_lea.vmem %s3, %s229
        %s231 = smul.u32 8, %s14
        %s232 = smul.u32 8, %s14
        %p233 = scmp.lt.s32.totalorder %s232, 15
        %s234 = scalar_select %p233, %s232, 15
        %s235 = smul.addr %s234, 8
        %s236 = scalar_lea.vmem %s3, %s235
        %s237 = smul.u32 8, %s14
        %v238 = vld [vmem:[%s210] sm:$0xff]
        %v239 = vld [vmem:[%s210 + $0x8] sm:$0xff]
        %v240 = vld [vmem:[%s210 + $0x10] sm:$0xff]
        %v241 = vld [vmem:[%s210 + $0x18] sm:$0xff]
        %v242 = vld [vmem:[%s210 + $0x20] sm:$0xff]
        %v243 = vld [vmem:[%s210 + $0x28] sm:$0xff]
        %v244 = vld [vmem:[%s210 + $0x30] sm:$0xff]
        %v245 = vld [vmem:[%s210 + $0x38] sm:$0xff]
        %v246 = vld [vmem:[%s1] sm:$0x1]
        %v248 = vlaneseq
        %v249 = vshrl.u32 %v248, 7
        %v250 = vsub.s32 0, %v249
        %v251 = vrot.slane %v246, %v250
        %v253 = vmul.f32 %v238, %v251
        %v254 = vmul.f32 %v239, %v251
        %v255 = vmul.f32 %v240, %v251
        %v256 = vmul.f32 %v241, %v251
        %v257 = vmul.f32 %v242, %v251
        %v258 = vmul.f32 %v243, %v251
        %v259 = vmul.f32 %v244, %v251
        %v260 = vmul.f32 %v245, %v251
        %v261 = vld [vmem:[%s2] sm:$0x1]
        %v263 = vlaneseq
        %v264 = vshrl.u32 %v263, 7
        %v265 = vsub.s32 0, %v264
        %v266 = vrot.slane %v261, %v265
        %v268 = vadd.f32 %v253, %v266
        %v269 = vadd.f32 %v254, %v266
        %v270 = vadd.f32 %v255, %v266
        %v271 = vadd.f32 %v256, %v266
        %v272 = vadd.f32 %v257, %v266
        %v273 = vadd.f32 %v258, %v266
        %v274 = vadd.f32 %v259, %v266
        %v275 = vadd.f32 %v260, %v266
        %v276 = vmax.f32 %v268, 0.0
        %v277 = vmax.f32 %v269, 0.0
        %v278 = vmax.f32 %v270, 0.0
        %v279 = vmax.f32 %v271, 0.0
        %v280 = vmax.f32 %v272, 0.0
        %v281 = vmax.f32 %v273, 0.0
        %v282 = vmax.f32 %v274, 0.0
        %v283 = vmax.f32 %v275, 0.0
        %284 = vst [vmem:[%s236] sm:$0xff] %v276
        %285 = vst [vmem:[%s236 + $0x8] sm:$0xff] %v277
        %286 = vst [vmem:[%s236 + $0x10] sm:$0xff] %v278
        %287 = vst [vmem:[%s236 + $0x18] sm:$0xff] %v279
        %288 = vst [vmem:[%s236 + $0x20] sm:$0xff] %v280
        %289 = vst [vmem:[%s236 + $0x28] sm:$0xff] %v281
        %290 = vst [vmem:[%s236 + $0x30] sm:$0xff] %v282
        %291 = vst [vmem:[%s236 + $0x38] sm:$0xff] %v283
        %s292 = smul.u32 8, %s14
        %p293 = scmp.lt.s32.totalorder %s292, 15
        %s294 = scalar_select %p293, %s292, 15
        %s295 = smul.addr %s294, 8
        %s296 = scalar_lea.vmem %s3, %s295
        // Predicated region
        $region71: #{basic_block_pallas.5} parent=65 // pred_check
          %p297 = pneg %p100
        $region72: #{basic_block_pallas.5} parent=65 // pred_check_branch
          %299 = sbr.rel (%p297) target = $region74
        $region73: #{basic_block_pallas.5} parent=65 // pred_region
          %s300 = smul.u32 8, %s14
        $region74: #{basic_block_pallas.5} parent=65 // pred_fallthru
          _
      $region66: #{basic_block_pallas.5} parent=5 // pred_fallthru
        _
      %p301 = scmp.le.s32.totalorder 2, %s9
      // Predicated region
      $region75: #{basic_block_pallas.5} parent=5 // pred_check
        %p302 = pneg %p301
      $region76: #{basic_block_pallas.5} parent=5 // pred_check_branch
        %304 = sbr.rel (%p302) target = $region78
      $region77: #{basic_block_pallas.5} parent=5 // pred_region
        %s305 = ssub.s32 %s9, 2
        // Predicated region
        $region79: #{basic_block_pallas.5} parent=77 // pred_check
          %p306 = pneg %p106
        $region80: #{basic_block_pallas.5} parent=77 // pred_check_branch
          %308 = sbr.rel (%p306) target = $region82
        $region81: #{basic_block_pallas.5} parent=77 // pred_region
          %s309 = smul.u32 8, %s15
          %p310 = scmp.lt.s32.totalorder %s309, 15
          %s311 = scalar_select %p310, %s309, 15
          %s312 = smul.addr %s311, 8
          %s313 = scalar_lea.vmem %s3, %s312
        $region82: #{basic_block_pallas.5} parent=77 // pred_fallthru
          _
      $region78: #{basic_block_pallas.5} parent=5 // pred_fallthru
        _
    $region6: #{basic_block_pallas.5} parent=1 // loop_footer
      %s13 = sadd.s32 1, %s9
    $region7: #{basic_block_pallas.5} parent=1 // loop_footer_branch
      %8 = sbr.rel target = $region3
    $region8: #{basic_block_pallas.5} parent=1 // loop_exit
      _

// kernel: basic_block_pallas.4
$region0: #{basic_block_pallas.4}
  #allocation0 [shape = 'u32[]', space=smem, size = 0x4, offset = 0x4, fixed_abs, tag = 'smem constant byte address 0x4 - core index']
  #allocation1 [shape = 'u32[144,128]{1,0:T(1,128)}', space=vmem, size = 0x12000, scoped, tag = 'internal scratch']
  %s0 = inlined_call_operand.vmem [shape: f32[128,128], index: 0, kind: input, shape index: {}]
  %s1 = inlined_call_operand.vmem [shape: f32[128,256], index: 1, kind: input, shape index: {}]
  %s2 = inlined_call_operand.vmem [shape: f32[128,256], index: 2, kind: output, shape index: {0}]
  %s3 = inlined_call_operand.vmem [shape: f32[2,256], index: 3, kind: output, shape index: {1}]
  %4 = xla_tuple %s2, %s3
  %s5 = sld [smem:[#allocation0]]
  $region53: #{basic_block_pallas.4} parent=0
    _
  %s7 = ssub.s32 1, %s5
  %s8 = scalar_select 0, %s7, %s5
  loop: start=0, step=1, limit=4
  $region2: #{basic_block_pallas.4} parent=0 // loop_pre_header
    _
  $region3: #{basic_block_pallas.4} parent=0 // loop_header
    %s10 = sphi 0, %s14
    %p11 = scmp.ge.s32.totalorder %s10, 4
    %s20 = sphi 0, %s22
    %s23 = sphi 0, %s20
    %s24 = sphi 0, %s23
    %s40 = sphi 0, %s24
    %s44 = sphi 0, %s44
    %s46 = sphi 0, %s44
    %s47 = sphi 0, %s46
    %s61 = sphi 0, %s47
    %s67 = sphi 0, %s69
    %s70 = sphi 0, %s67
    %s71 = sphi 0, %s70
    %s87 = sphi 0, %s71
    %s91 = sphi 0, %s91
    %s93 = sphi 0, %s91
    %s94 = sphi 0, %s93
    %s108 = sphi 0, %s94
  $region4: #{basic_block_pallas.4} parent=0 // loop_header_branch
    %13 = sbr.rel (%p11) target = $region8
  $region5: #{basic_block_pallas.4} parent=0 // loop_body
    %s15 = ssub.s32 %s10, 1
    %s16 = ssub.s32 %s10, 2
    %s17 = sadd.s32 %s10, 1
    %s18 = ssub.s32 %s10, %s17
    %p19 = scmp.eq.s32.totalorder %s18, 0
    %s21 = sadd.s32 %s20, 1
    %s22 = scalar_select %p19, %s20, %s21
    %p25 = pneg %p19
    %p26 = scmp.eq.s32.totalorder %s10, 1
    %p27 = por %p25, %p26
    %p28 = scmp.ne.s32.totalorder %s20, %s23
    %p29 = scmp.eq.s32.totalorder %s10, 0
    %p30 = por %p28, %p29
    %p31 = scmp.ne.s32.totalorder %s20, %s23
    %p32 = scmp.eq.s32.totalorder %s15, 1
    %p33 = por %p31, %p32
    %p34 = scmp.ne.s32.totalorder %s23, %s24
    %p35 = scmp.eq.s32.totalorder %s15, 0
    %p36 = por %p34, %p35
    %p37 = scmp.ne.s32.totalorder %s23, %s24
    %p38 = scmp.eq.s32.totalorder %s16, 1
    %p39 = por %p37, %p38
    %p41 = scmp.ne.s32.totalorder %s24, %s40
    %p42 = scmp.eq.s32.totalorder %s16, 0
    %p43 = por %p41, %p42
    %s45 = sadd.s32 %s44, 1
    %p48 = scmp.eq.s32.totalorder %s10, 1
    %p49 = scmp.ne.s32.totalorder %s44, %s46
    %p50 = scmp.eq.s32.totalorder %s10, 0
    %p51 = por %p49, %p50
    %p52 = scmp.ne.s32.totalorder %s44, %s46
    %p53 = scmp.eq.s32.totalorder %s15, 1
    %p54 = por %p52, %p53
    %p55 = scmp.ne.s32.totalorder %s46, %s47
    %p56 = scmp.eq.s32.totalorder %s15, 0
    %p57 = por %p55, %p56
    %p58 = scmp.ne.s32.totalorder %s46, %s47
    %p59 = scmp.eq.s32.totalorder %s16, 1
    %p60 = por %p58, %p59
    %p62 = scmp.ne.s32.totalorder %s47, %s61
    %p63 = scmp.eq.s32.totalorder %s16, 0
    %p64 = por %p62, %p63
    %s65 = ssub.s32 %s10, %s17
    %p66 = scmp.eq.s32.totalorder %s65, 0
    %s68 = sadd.s32 %s67, 1
    %s69 = scalar_select %p66, %s67, %s68
    %p72 = pneg %p66
    %p73 = scmp.eq.s32.totalorder %s10, 1
    %p74 = por %p72, %p73
    %p75 = scmp.ne.s32.totalorder %s67, %s70
    %p76 = scmp.eq.s32.totalorder %s10, 0
    %p77 = por %p75, %p76
    %p78 = scmp.ne.s32.totalorder %s67, %s70
    %p79 = scmp.eq.s32.totalorder %s15, 1
    %p80 = por %p78, %p79
    %p81 = scmp.ne.s32.totalorder %s70, %s71
    %p82 = scmp.eq.s32.totalorder %s15, 0
    %p83 = por %p81, %p82
    %p84 = scmp.ne.s32.totalorder %s70, %s71
    %p85 = scmp.eq.s32.totalorder %s16, 1
    %p86 = por %p84, %p85
    %p88 = scmp.ne.s32.totalorder %s71, %s87
    %p89 = scmp.eq.s32.totalorder %s16, 0
    %p90 = por %p88, %p89
    %s92 = sadd.s32 %s91, 1
    %p95 = scmp.eq.s32.totalorder %s10, 1
    %p96 = scmp.ne.s32.totalorder %s91, %s93
    %p97 = scmp.eq.s32.totalorder %s10, 0
    %p98 = por %p96, %p97
    %p99 = scmp.ne.s32.totalorder %s91, %s93
    %p100 = scmp.eq.s32.totalorder %s15, 1
    %p101 = por %p99, %p100
    %p102 = scmp.ne.s32.totalorder %s93, %s94
    %p103 = scmp.eq.s32.totalorder %s15, 0
    %p104 = por %p102, %p103
    %p105 = scmp.ne.s32.totalorder %s93, %s94
    %p106 = scmp.eq.s32.totalorder %s16, 1
    %p107 = por %p105, %p106
    %p109 = scmp.ne.s32.totalorder %s94, %s108
    %p110 = scmp.eq.s32.totalorder %s16, 0
    %p111 = por %p109, %p110
    %p112 = scmp.le.s32.totalorder 1, %s10
    %p113 = scmp.lt.s32.totalorder %s10, 3
    %p114 = pnand %p112, %p113
    %p115 = pneg %p114
    // Predicated region
    $region9: #{basic_block_pallas.4} parent=5 // pred_check
      _
    $region10: #{basic_block_pallas.4} parent=5 // pred_check_branch
      %117 = sbr.rel (%p114) target = $region12
    $region11: #{basic_block_pallas.4} parent=5 // pred_region
      %s118 = ssub.s32 %s10, 1
      // Predicated region
      $region13: #{basic_block_pallas.4} parent=11 // pred_check
        %p119 = pneg %p57
      $region14: #{basic_block_pallas.4} parent=11 // pred_check_branch
        %121 = sbr.rel (%p119) target = $region16
      $region15: #{basic_block_pallas.4} parent=11 // pred_region
        _
      $region16: #{basic_block_pallas.4} parent=11 // pred_fallthru
        _
    $region12: #{basic_block_pallas.4} parent=5 // pred_fallthru
      _
    %p122 = scmp.lt.s32.totalorder %s10, 2
    // Predicated region
    $region17: #{basic_block_pallas.4} parent=5 // pred_check
      %p123 = pneg %p122
    $region18: #{basic_block_pallas.4} parent=5 // pred_check_branch
      %125 = sbr.rel (%p123) target = $region20
    $region19: #{basic_block_pallas.4} parent=5 // pred_region
      // Predicated region
      $region21: #{basic_block_pallas.4} parent=19 // pred_check
        %p126 = pneg %p30
      $region22: #{basic_block_pallas.4} parent=19 // pred_check_branch
        %128 = sbr.rel (%p126) target = $region24
      $region23: #{basic_block_pallas.4} parent=19 // pred_region
        %s129 = smul.u32 8, %s10
        %p130 = scmp.lt.s32.totalorder %s129, 15
        %s131 = scalar_select %p130, %s129, 15
        %s132 = smul.addr %s131, 8
        %s133 = scalar_lea.vmem %s0, %s132
        %s134 = smul.u32 8, %s10
      $region24: #{basic_block_pallas.4} parent=19 // pred_fallthru
        _
    $region20: #{basic_block_pallas.4} parent=5 // pred_fallthru
      _
    %p135 = scmp.le.s32.totalorder 1, %s10
    %p136 = scmp.lt.s32.totalorder %s10, 3
    %p137 = pnand %p135, %p136
    %p138 = pneg %p137
    // Predicated region
    $region25: #{basic_block_pallas.4} parent=5 // pred_check
      _
    $region26: #{basic_block_pallas.4} parent=5 // pred_check_branch
      %140 = sbr.rel (%p137) target = $region28
    $region27: #{basic_block_pallas.4} parent=5 // pred_region
      %s141 = ssub.s32 %s10, 1
      %s142 = smul.u32 8, %s15
      %p143 = scmp.lt.s32.totalorder %s142, 15
      %s144 = scalar_select %p143, %s142, 15
      %s145 = smul.addr %s144, 8
      %s146 = scalar_lea.vmem %s0, %s145
      %p147 = pneg %p36
      %p148 = pneg %p33
      %p149 = pneg %p57
      %p150 = pneg %p54
      %p151 = pneg %p83
      %p152 = pneg %p80
      %s153 = smul.u32 8, %s15
      %p154 = scmp.lt.s32.totalorder %s153, 15
      %s155 = scalar_select %p154, %s153, 15
      %s156 = smul.addr %s155, 2
      %s157 = smul.addr %s156, 8
      %s158 = scalar_lea.vmem %s2, %s157
      %p159 = pneg %p104
      %p160 = pneg %p101
      %s161 = smul.u32 8, %s15
      %p162 = scmp.lt.s32.totalorder %s161, 15
      %s163 = scalar_select %p162, %s161, 15
      %s164 = smul.addr %s163, 8
      %s165 = scalar_lea.vmem %s0, %s164
      %s166 = smul.u32 8, %s15
      %s167 = smul.u32 8, %s15
      %p168 = scmp.lt.s32.totalorder %s167, 15
      %s169 = scalar_select %p168, %s167, 15
      %s170 = smul.addr %s169, 2
      %s171 = smul.addr %s170, 8
      %s172 = scalar_lea.vmem %s2, %s171
      %s173 = smul.u32 8, %s15
      %p174 = scmp.eq.s32.totalorder %s15, 0
      // Predicated region
      $region29: #{basic_block_pallas.4} parent=27 // pred_check
        %p175 = pneg %p174
      $region30: #{basic_block_pallas.4} parent=27 // pred_check_branch
        %177 = sbr.rel (%p175) target = $region32
      $region31: #{basic_block_pallas.4} parent=27 // pred_region
        %178 = vst [vmem:[%s3] sm:$0xf] 0.0
      $region32: #{basic_block_pallas.4} parent=27 // pred_fallthru
        _
      %v179 = vld [vmem:[%s165] sm:$0xff]
      %v180 = vld [vmem:[%s165 + $0x8] sm:$0xff]
      %v181 = vld [vmem:[%s165 + $0x10] sm:$0xff]
      %v182 = vld [vmem:[%s165 + $0x18] sm:$0xff]
      %v183 = vld [vmem:[%s165 + $0x20] sm:$0xff]
      %v184 = vld [vmem:[%s165 + $0x28] sm:$0xff]
      %v185 = vld [vmem:[%s165 + $0x30] sm:$0xff]
      %v186 = vld [vmem:[%s165 + $0x38] sm:$0xff]
      %v187 = vld [vmem:[%s1] sm:$0xff]
      %v188 = vld [vmem:[%s1 + $0x8] sm:$0xff]
      %v189 = vld [vmem:[%s1 + $0x10] sm:$0xff]
      %v190 = vld [vmem:[%s1 + $0x18] sm:$0xff]
      %v191 = vld [vmem:[%s1 + $0x20] sm:$0xff]
      %v192 = vld [vmem:[%s1 + $0x28] sm:$0xff]
      %v193 = vld [vmem:[%s1 + $0x30] sm:$0xff]
      %v194 = vld [vmem:[%s1 + $0x38] sm:$0xff]
      %v195 = vld [vmem:[%s1 + $0x40] sm:$0xff]
      %v196 = vld [vmem:[%s1 + $0x48] sm:$0xff]
      %v197 = vld [vmem:[%s1 + $0x50] sm:$0xff]
      %v198 = vld [vmem:[%s1 + $0x58] sm:$0xff]
      %v199 = vld [vmem:[%s1 + $0x60] sm:$0xff]
      %v200 = vld [vmem:[%s1 + $0x68] sm:$0xff]
      %v201 = vld [vmem:[%s1 + $0x70] sm:$0xff]
      %v202 = vld [vmem:[%s1 + $0x78] sm:$0xff]
      %v203 = vld [vmem:[%s1 + $0x80] sm:$0xff]
      %v204 = vld [vmem:[%s1 + $0x88] sm:$0xff]
      %v205 = vld [vmem:[%s1 + $0x90] sm:$0xff]
      %v206 = vld [vmem:[%s1 + $0x98] sm:$0xff]
      %v207 = vld [vmem:[%s1 + $0xa0] sm:$0xff]
      %v208 = vld [vmem:[%s1 + $0xa8] sm:$0xff]
      %v209 = vld [vmem:[%s1 + $0xb0] sm:$0xff]
      %v210 = vld [vmem:[%s1 + $0xb8] sm:$0xff]
      %v211 = vld [vmem:[%s1 + $0xc0] sm:$0xff]
      %v212 = vld [vmem:[%s1 + $0xc8] sm:$0xff]
      %v213 = vld [vmem:[%s1 + $0xd0] sm:$0xff]
      %v214 = vld [vmem:[%s1 + $0xd8] sm:$0xff]
      %v215 = vld [vmem:[%s1 + $0xe0] sm:$0xff]
      %v216 = vld [vmem:[%s1 + $0xe8] sm:$0xff]
      %v217 = vld [vmem:[%s1 + $0xf0] sm:$0xff]
      %v218 = vld [vmem:[%s1 + $0xf8] sm:$0xff]
      %219 = vmatprep.subr.mxu0 %v218
      %220 = vmatpush1.msra.mxu0 %v217
      %221 = vmatprep.subr.mxu0 %v216
      %222 = vmatpush1.msra.mxu0 %v215
      %223 = vmatprep.subr.mxu0 %v214
      %224 = vmatpush1.msra.mxu0 %v213
      %225 = vmatprep.subr.mxu0 %v212
      %226 = vmatpush1.msra.mxu0 %v211
      %227 = vmatprep.subr.mxu0 %v210
      %228 = vmatpush1.msra.mxu0 %v209
      %229 = vmatprep.subr.mxu0 %v208
      %230 = vmatpush1.msra.mxu0 %v207
      %231 = vmatprep.subr.mxu0 %v206
      %232 = vmatpush1.msra.mxu0 %v205
      %233 = vmatprep.subr.mxu0 %v204
      %234 = vmatpush1.msra.mxu0 %v203
      %235 = vmatprep.subr.mxu0 %v202
      %236 = vmatpush1.msra.mxu0 %v201
      %237 = vmatprep.subr.mxu0 %v200
      %238 = vmatpush1.msra.mxu0 %v199
      %239 = vmatprep.subr.mxu0 %v198
      %240 = vmatpush1.msra.mxu0 %v197
      %241 = vmatprep.subr.mxu0 %v196
      %242 = vmatpush1.msra.mxu0 %v195
      %243 = vmatprep.subr.mxu0 %v194
      %244 = vmatpush1.msra.mxu0 %v193
      %245 = vmatprep.subr.mxu0 %v192
      %246 = vmatpush1.msra.mxu0 %v191
      %247 = vmatprep.subr.mxu0 %v190
      %248 = vmatpush1.msra.mxu0 %v189
      %249 = vmatprep.subr.mxu0 %v188
      %250 = vmatpush1.msra.mxu0 %v187
      %251 = vmatprep.subr.mxu0 0.0
      %252 = vmatpush2.msra.mxu0 0.0
      %253 = vmatprep.subr.mxu0 0.0
      %254 = vmatpush2.msra.mxu0 0.0
      %255 = vmatprep.subr.mxu0 0.0
      %256 = vmatpush2.msra.mxu0 0.0
      %257 = vmatprep.subr.mxu0 0.0
      %258 = vmatpush2.msra.mxu0 0.0
      %259 = vmatprep.subr.mxu0 0.0
      %260 = vmatpush2.msra.mxu0 0.0
      %261 = vmatprep.subr.mxu0 0.0
      %262 = vmatpush2.msra.mxu0 0.0
      %263 = vmatprep.subr.mxu0 0.0
      %264 = vmatpush2.msra.mxu0 0.0
      %265 = vmatprep.subr.mxu0 0.0
      %266 = vmatpush2.msra.mxu0 0.0
      %267 = vmatprep.subr.mxu0 0.0
      %268 = vmatpush2.msra.mxu0 0.0
      %269 = vmatprep.subr.mxu0 0.0
      %270 = vmatpush2.msra.mxu0 0.0
      %271 = vmatprep.subr.mxu0 0.0
      %272 = vmatpush2.msra.mxu0 0.0
      %273 = vmatprep.subr.mxu0 0.0
      %274 = vmatpush2.msra.mxu0 0.0
      %275 = vmatprep.subr.mxu0 0.0
      %276 = vmatpush2.msra.mxu0 0.0
      %277 = vmatprep.subr.mxu0 0.0
      %278 = vmatpush2.msra.mxu0 0.0
      %279 = vmatprep.subr.mxu0 0.0
      %280 = vmatpush2.msra.mxu0 0.0
      %281 = vmatprep.subr.mxu0 0.0
      %282 = vmatpush2.msra.mxu0 0.0
      %283 = vmatprep.mubr.f32.mxu0 0.0
      %284 = vmatmul.mubr.f32.gmra.mxu0 %v179
      %v285 = vpop.f32.mrf.mxu0
      %v286 = vadd.f32 0.0, %v285
      %v287 = vpop.f32.mrf.mxu0
      %v288 = vadd.f32 0.0, %v287
      %289 = vmatprep.mubr.f32.mxu0 0.0
      %290 = vmatmul.mubr.f32.gmra.mxu0 %v180
      %v291 = vpop.f32.mrf.mxu0
      %v292 = vadd.f32 0.0, %v291
      %v293 = vpop.f32.mrf.mxu0
      %v294 = vadd.f32 0.0, %v293
      %295 = vmatprep.mubr.f32.mxu0 0.0
      %296 = vmatmul.mubr.f32.gmra.mxu0 %v181
      %v297 = vpop.f32.mrf.mxu0
      %v298 = vadd.f32 0.0, %v297
      %v299 = vpop.f32.mrf.mxu0
      %v300 = vadd.f32 0.0, %v299
      %301 = vmatprep.mubr.f32.mxu0 0.0
      %302 = vmatmul.mubr.f32.gmra.mxu0 %v182
      %v303 = vpop.f32.mrf.mxu0
      %v304 = vadd.f32 0.0, %v303
      %v305 = vpop.f32.mrf.mxu0
      %v306 = vadd.f32 0.0, %v305
      %307 = vmatprep.mubr.f32.mxu0 0.0
      %308 = vmatmul.mubr.f32.gmra.mxu0 %v183
      %v309 = vpop.f32.mrf.mxu0
      %v310 = vadd.f32 0.0, %v309
      %v311 = vpop.f32.mrf.mxu0
      %v312 = vadd.f32 0.0, %v311
      %313 = vmatprep.mubr.f32.mxu0 0.0
      %314 = vmatmul.mubr.f32.gmra.mxu0 %v184
      %v315 = vpop.f32.mrf.mxu0
      %v316 = vadd.f32 0.0, %v315
      %v317 = vpop.f32.mrf.mxu0
      %v318 = vadd.f32 0.0, %v317
      %319 = vmatprep.mubr.f32.mxu0 0.0
      %320 = vmatmul.mubr.f32.gmra.mxu0 %v185
      %v321 = vpop.f32.mrf.mxu0
      %v322 = vadd.f32 0.0, %v321
      %v323 = vpop.f32.mrf.mxu0
      %v324 = vadd.f32 0.0, %v323
      %325 = vmatprep.mubr.f32.mxu0 0.0
      %326 = vmatmul.mubr.f32.gmra.mxu0 %v186
      %v327 = vpop.f32.mrf.mxu0
      %v328 = vadd.f32 0.0, %v327
      %v329 = vpop.f32.mrf.mxu0
      %v330 = vadd.f32 0.0, %v329
      %331 = vdwg.mxu0
      %332 = vst [vmem:[%s172] sm:$0xff] %v286
      %333 = vst [vmem:[%s172 + $0x8] sm:$0xff] %v288
      %334 = vst [vmem:[%s172 + $0x10] sm:$0xff] %v292
      %335 = vst [vmem:[%s172 + $0x18] sm:$0xff] %v294
      %336 = vst [vmem:[%s172 + $0x20] sm:$0xff] %v298
      %337 = vst [vmem:[%s172 + $0x28] sm:$0xff] %v300
      %338 = vst [vmem:[%s172 + $0x30] sm:$0xff] %v304
      %339 = vst [vmem:[%s172 + $0x38] sm:$0xff] %v306
      %340 = vst [vmem:[%s172 + $0x40] sm:$0xff] %v310
      %341 = vst [vmem:[%s172 + $0x48] sm:$0xff] %v312
      %342 = vst [vmem:[%s172 + $0x50] sm:$0xff] %v316
      %343 = vst [vmem:[%s172 + $0x58] sm:$0xff] %v318
      %344 = vst [vmem:[%s172 + $0x60] sm:$0xff] %v322
      %345 = vst [vmem:[%s172 + $0x68] sm:$0xff] %v324
      %346 = vst [vmem:[%s172 + $0x70] sm:$0xff] %v328
      %347 = vst [vmem:[%s172 + $0x78] sm:$0xff] %v330
      %v348 = vld [vmem:[%s3] sm:$0xf]
      %v349 = vadd.f32 %v286, %v292
      %v350 = vadd.f32 %v349, %v298
      %v351 = vadd.f32 %v350, %v304
      %v352 = vadd.f32 %v351, %v310
      %v353 = vadd.f32 %v352, %v316
      %v354 = vadd.f32 %v353, %v322
      %v355 = vadd.f32 %v354, %v328
      %v356 = vrot.slane %v355, 4
      %v357 = vadd.f32 %v355, %v356
      %v358 = vrot.slane %v357, 2
      %v359 = vadd.f32 %v357, %v358
      %v360 = vrot.slane %v359, 1
      %v361 = vadd.f32 %v359, %v360
      %v362 = vadd.f32 %v288, %v294
      %v363 = vadd.f32 %v362, %v300
      %v364 = vadd.f32 %v363, %v306
      %v365 = vadd.f32 %v364, %v312
      %v366 = vadd.f32 %v365, %v318
      %v367 = vadd.f32 %v366, %v324
      %v368 = vadd.f32 %v367, %v330
      %v369 = vrot.slane %v368, 4
      %v370 = vadd.f32 %v368, %v369
      %v371 = vrot.slane %v370, 2
      %v372 = vadd.f32 %v370, %v371
      %v373 = vrot.slane %v372, 1
      %v374 = vadd.f32 %v372, %v373
      %v375 = vmul.f32 %v286, %v286
      %v376 = vmul.f32 %v288, %v288
      %v377 = vmul.f32 %v292, %v292
      %v378 = vmul.f32 %v294, %v294
      %v379 = vmul.f32 %v298, %v298
      %v380 = vmul.f32 %v300, %v300
      %v381 = vmul.f32 %v304, %v304
      %v382 = vmul.f32 %v306, %v306
      %v383 = vmul.f32 %v310, %v310
      %v384 = vmul.f32 %v312, %v312
      %v385 = vmul.f32 %v316, %v316
      %v386 = vmul.f32 %v318, %v318
      %v387 = vmul.f32 %v322, %v322
      %v388 = vmul.f32 %v324, %v324
      %v389 = vmul.f32 %v328, %v328
      %v390 = vmul.f32 %v330, %v330
      %v391 = vadd.f32 %v375, %v377
      %v392 = vadd.f32 %v391, %v379
      %v393 = vadd.f32 %v392, %v381
      %v394 = vadd.f32 %v393, %v383
      %v395 = vadd.f32 %v394, %v385
      %v396 = vadd.f32 %v395, %v387
      %v397 = vadd.f32 %v396, %v389
      %v398 = vrot.slane %v397, 4
      %v399 = vadd.f32 %v397, %v398
      %v400 = vrot.slane %v399, 2
      %v401 = vadd.f32 %v399, %v400
      %v402 = vrot.slane %v401, 1
      %v403 = vadd.f32 %v401, %v402
      %v404 = vadd.f32 %v376, %v378
      %v405 = vadd.f32 %v404, %v380
      %v406 = vadd.f32 %v405, %v382
      %v407 = vadd.f32 %v406, %v384
      %v408 = vadd.f32 %v407, %v386
      %v409 = vadd.f32 %v408, %v388
      %v410 = vadd.f32 %v409, %v390
      %v411 = vrot.slane %v410, 4
      %v412 = vadd.f32 %v410, %v411
      %v413 = vrot.slane %v412, 2
      %v414 = vadd.f32 %v412, %v413
      %v415 = vrot.slane %v414, 1
      %v416 = vadd.f32 %v414, %v415
      %vm417 = vcmask 1040384
      %v418 = vsel %vm417, %v361, %v403
      %v419 = vsel %vm417, %v374, %v416
      %v422 = vcombine.low %v418, %v419
      %v424 = vunpack.c.l.s4 1983009808
      %v425 = vunpack.c.0.s8 %v424
      %v426 = vlaneseq
      %v427 = vshrl.u32 %v426, 7
      %v428 = vsub.s32 %v425, %v427
      %v429 = vrot.slane %v422, %v428
      %v431 = vadd.f32 %v348, %v429
      %432 = vst [vmem:[%s3] sm:$0xf] %v431
      %s433 = smul.u32 8, %s15
      %p434 = scmp.lt.s32.totalorder %s433, 15
      %s435 = scalar_select %p434, %s433, 15
      %s436 = smul.addr %s435, 2
      %s437 = smul.addr %s436, 8
      %s438 = scalar_lea.vmem %s2, %s437
      // Predicated region
      $region33: #{basic_block_pallas.4} parent=27 // pred_check
        %p439 = pneg %p80
      $region34: #{basic_block_pallas.4} parent=27 // pred_check_branch
        %441 = sbr.rel (%p439) target = $region36
      $region35: #{basic_block_pallas.4} parent=27 // pred_region
        %s442 = smul.u32 8, %s15
      $region36: #{basic_block_pallas.4} parent=27 // pred_fallthru
        _
      // Predicated region
      $region37: #{basic_block_pallas.4} parent=27 // pred_check
        %p443 = pneg %p101
      $region38: #{basic_block_pallas.4} parent=27 // pred_check_branch
        %445 = sbr.rel (%p443) target = $region40
      $region39: #{basic_block_pallas.4} parent=27 // pred_region
        _
      $region40: #{basic_block_pallas.4} parent=27 // pred_fallthru
        _
      // Predicated region
      $region41: #{basic_block_pallas.4} parent=27 // pred_check
        %p446 = pneg %p101
      $region42: #{basic_block_pallas.4} parent=27 // pred_check_branch
        %448 = sbr.rel (%p446) target = $region44
      $region43: #{basic_block_pallas.4} parent=27 // pred_region
        _
      $region44: #{basic_block_pallas.4} parent=27 // pred_fallthru
        _
    $region28: #{basic_block_pallas.4} parent=5 // pred_fallthru
      _
    %p449 = scmp.le.s32.totalorder 2, %s10
    // Predicated region
    $region45: #{basic_block_pallas.4} parent=5 // pred_check
      %p450 = pneg %p449
    $region46: #{basic_block_pallas.4} parent=5 // pred_check_branch
      %452 = sbr.rel (%p450) target = $region48
    $region47: #{basic_block_pallas.4} parent=5 // pred_region
      %s453 = ssub.s32 %s10, 2
      // Predicated region
      $region49: #{basic_block_pallas.4} parent=47 // pred_check
        %p454 = pneg %p86
      $region50: #{basic_block_pallas.4} parent=47 // pred_check_branch
        %456 = sbr.rel (%p454) target = $region52
      $region51: #{basic_block_pallas.4} parent=47 // pred_region
        %s457 = smul.u32 8, %s16
        %p458 = scmp.lt.s32.totalorder %s457, 15
        %s459 = scalar_select %p458, %s457, 15
        %s460 = smul.addr %s459, 2
        %s461 = smul.addr %s460, 8
        %s462 = scalar_lea.vmem %s2, %s461
      $region52: #{basic_block_pallas.4} parent=47 // pred_fallthru
        _
    $region48: #{basic_block_pallas.4} parent=5 // pred_fallthru
      _
  $region6: #{basic_block_pallas.4} parent=0 // loop_footer
    %s14 = sadd.s32 1, %s10
  $region7: #{basic_block_pallas.4} parent=0 // loop_footer_branch
    %9 = sbr.rel target = $region3
  $region8: #{basic_block_pallas.4} parent=0 // loop_exit
    _

// kernel: basic_block_pallas.6
$region0: #{basic_block_pallas.6}
  #allocation0 [shape = 'u32[]', space=smem, size = 0x4, offset = 0x4, fixed_abs, tag = 'smem constant byte address 0x4 - core index']
  #allocation1 [shape = 'u32[144,128]{1,0:T(1,128)}', space=vmem, size = 0x12000, scoped, tag = 'internal scratch']
  %s0 = inlined_call_operand.vmem [shape: f32[128,128], index: 0, kind: input, shape index: {}]
  %s1 = inlined_call_operand.vmem [shape: f32[128,128], index: 1, kind: input, shape index: {}]
  %s2 = inlined_call_operand.vmem [shape: f32[128,128], index: 2, kind: output, shape index: {0}]
  %s3 = inlined_call_operand.vmem [shape: f32[2,128], index: 3, kind: output, shape index: {1}]
  %4 = xla_tuple %s2, %s3
  %s5 = sld [smem:[#allocation0]]
  $region53: #{basic_block_pallas.6} parent=0
    _
  %s7 = ssub.s32 1, %s5
  %s8 = scalar_select 0, %s7, %s5
  loop: start=0, step=1, limit=4
  $region2: #{basic_block_pallas.6} parent=0 // loop_pre_header
    _
  $region3: #{basic_block_pallas.6} parent=0 // loop_header
    %s10 = sphi 0, %s14
    %p11 = scmp.ge.s32.totalorder %s10, 4
    %s20 = sphi 0, %s22
    %s23 = sphi 0, %s20
    %s24 = sphi 0, %s23
    %s40 = sphi 0, %s24
    %s44 = sphi 0, %s44
    %s46 = sphi 0, %s44
    %s47 = sphi 0, %s46
    %s61 = sphi 0, %s47
    %s67 = sphi 0, %s69
    %s70 = sphi 0, %s67
    %s71 = sphi 0, %s70
    %s87 = sphi 0, %s71
    %s91 = sphi 0, %s91
    %s93 = sphi 0, %s91
    %s94 = sphi 0, %s93
    %s108 = sphi 0, %s94
  $region4: #{basic_block_pallas.6} parent=0 // loop_header_branch
    %13 = sbr.rel (%p11) target = $region8
  $region5: #{basic_block_pallas.6} parent=0 // loop_body
    %s15 = ssub.s32 %s10, 1
    %s16 = ssub.s32 %s10, 2
    %s17 = sadd.s32 %s10, 1
    %s18 = ssub.s32 %s10, %s17
    %p19 = scmp.eq.s32.totalorder %s18, 0
    %s21 = sadd.s32 %s20, 1
    %s22 = scalar_select %p19, %s20, %s21
    %p25 = pneg %p19
    %p26 = scmp.eq.s32.totalorder %s10, 1
    %p27 = por %p25, %p26
    %p28 = scmp.ne.s32.totalorder %s20, %s23
    %p29 = scmp.eq.s32.totalorder %s10, 0
    %p30 = por %p28, %p29
    %p31 = scmp.ne.s32.totalorder %s20, %s23
    %p32 = scmp.eq.s32.totalorder %s15, 1
    %p33 = por %p31, %p32
    %p34 = scmp.ne.s32.totalorder %s23, %s24
    %p35 = scmp.eq.s32.totalorder %s15, 0
    %p36 = por %p34, %p35
    %p37 = scmp.ne.s32.totalorder %s23, %s24
    %p38 = scmp.eq.s32.totalorder %s16, 1
    %p39 = por %p37, %p38
    %p41 = scmp.ne.s32.totalorder %s24, %s40
    %p42 = scmp.eq.s32.totalorder %s16, 0
    %p43 = por %p41, %p42
    %s45 = sadd.s32 %s44, 1
    %p48 = scmp.eq.s32.totalorder %s10, 1
    %p49 = scmp.ne.s32.totalorder %s44, %s46
    %p50 = scmp.eq.s32.totalorder %s10, 0
    %p51 = por %p49, %p50
    %p52 = scmp.ne.s32.totalorder %s44, %s46
    %p53 = scmp.eq.s32.totalorder %s15, 1
    %p54 = por %p52, %p53
    %p55 = scmp.ne.s32.totalorder %s46, %s47
    %p56 = scmp.eq.s32.totalorder %s15, 0
    %p57 = por %p55, %p56
    %p58 = scmp.ne.s32.totalorder %s46, %s47
    %p59 = scmp.eq.s32.totalorder %s16, 1
    %p60 = por %p58, %p59
    %p62 = scmp.ne.s32.totalorder %s47, %s61
    %p63 = scmp.eq.s32.totalorder %s16, 0
    %p64 = por %p62, %p63
    %s65 = ssub.s32 %s10, %s17
    %p66 = scmp.eq.s32.totalorder %s65, 0
    %s68 = sadd.s32 %s67, 1
    %s69 = scalar_select %p66, %s67, %s68
    %p72 = pneg %p66
    %p73 = scmp.eq.s32.totalorder %s10, 1
    %p74 = por %p72, %p73
    %p75 = scmp.ne.s32.totalorder %s67, %s70
    %p76 = scmp.eq.s32.totalorder %s10, 0
    %p77 = por %p75, %p76
    %p78 = scmp.ne.s32.totalorder %s67, %s70
    %p79 = scmp.eq.s32.totalorder %s15, 1
    %p80 = por %p78, %p79
    %p81 = scmp.ne.s32.totalorder %s70, %s71
    %p82 = scmp.eq.s32.totalorder %s15, 0
    %p83 = por %p81, %p82
    %p84 = scmp.ne.s32.totalorder %s70, %s71
    %p85 = scmp.eq.s32.totalorder %s16, 1
    %p86 = por %p84, %p85
    %p88 = scmp.ne.s32.totalorder %s71, %s87
    %p89 = scmp.eq.s32.totalorder %s16, 0
    %p90 = por %p88, %p89
    %s92 = sadd.s32 %s91, 1
    %p95 = scmp.eq.s32.totalorder %s10, 1
    %p96 = scmp.ne.s32.totalorder %s91, %s93
    %p97 = scmp.eq.s32.totalorder %s10, 0
    %p98 = por %p96, %p97
    %p99 = scmp.ne.s32.totalorder %s91, %s93
    %p100 = scmp.eq.s32.totalorder %s15, 1
    %p101 = por %p99, %p100
    %p102 = scmp.ne.s32.totalorder %s93, %s94
    %p103 = scmp.eq.s32.totalorder %s15, 0
    %p104 = por %p102, %p103
    %p105 = scmp.ne.s32.totalorder %s93, %s94
    %p106 = scmp.eq.s32.totalorder %s16, 1
    %p107 = por %p105, %p106
    %p109 = scmp.ne.s32.totalorder %s94, %s108
    %p110 = scmp.eq.s32.totalorder %s16, 0
    %p111 = por %p109, %p110
    %p112 = scmp.le.s32.totalorder 1, %s10
    %p113 = scmp.lt.s32.totalorder %s10, 3
    %p114 = pnand %p112, %p113
    %p115 = pneg %p114
    // Predicated region
    $region9: #{basic_block_pallas.6} parent=5 // pred_check
      _
    $region10: #{basic_block_pallas.6} parent=5 // pred_check_branch
      %117 = sbr.rel (%p114) target = $region12
    $region11: #{basic_block_pallas.6} parent=5 // pred_region
      %s118 = ssub.s32 %s10, 1
      // Predicated region
      $region13: #{basic_block_pallas.6} parent=11 // pred_check
        %p119 = pneg %p57
      $region14: #{basic_block_pallas.6} parent=11 // pred_check_branch
        %121 = sbr.rel (%p119) target = $region16
      $region15: #{basic_block_pallas.6} parent=11 // pred_region
        _
      $region16: #{basic_block_pallas.6} parent=11 // pred_fallthru
        _
    $region12: #{basic_block_pallas.6} parent=5 // pred_fallthru
      _
    %p122 = scmp.lt.s32.totalorder %s10, 2
    // Predicated region
    $region17: #{basic_block_pallas.6} parent=5 // pred_check
      %p123 = pneg %p122
    $region18: #{basic_block_pallas.6} parent=5 // pred_check_branch
      %125 = sbr.rel (%p123) target = $region20
    $region19: #{basic_block_pallas.6} parent=5 // pred_region
      // Predicated region
      $region21: #{basic_block_pallas.6} parent=19 // pred_check
        %p126 = pneg %p30
      $region22: #{basic_block_pallas.6} parent=19 // pred_check_branch
        %128 = sbr.rel (%p126) target = $region24
      $region23: #{basic_block_pallas.6} parent=19 // pred_region
        %s129 = smul.u32 8, %s10
        %p130 = scmp.lt.s32.totalorder %s129, 15
        %s131 = scalar_select %p130, %s129, 15
        %s132 = smul.addr %s131, 8
        %s133 = scalar_lea.vmem %s0, %s132
        %s134 = smul.u32 8, %s10
      $region24: #{basic_block_pallas.6} parent=19 // pred_fallthru
        _
    $region20: #{basic_block_pallas.6} parent=5 // pred_fallthru
      _
    %p135 = scmp.le.s32.totalorder 1, %s10
    %p136 = scmp.lt.s32.totalorder %s10, 3
    %p137 = pnand %p135, %p136
    %p138 = pneg %p137
    // Predicated region
    $region25: #{basic_block_pallas.6} parent=5 // pred_check
      _
    $region26: #{basic_block_pallas.6} parent=5 // pred_check_branch
      %140 = sbr.rel (%p137) target = $region28
    $region27: #{basic_block_pallas.6} parent=5 // pred_region
      %s141 = ssub.s32 %s10, 1
      %s142 = smul.u32 8, %s15
      %p143 = scmp.lt.s32.totalorder %s142, 15
      %s144 = scalar_select %p143, %s142, 15
      %s145 = smul.addr %s144, 8
      %s146 = scalar_lea.vmem %s0, %s145
      %p147 = pneg %p36
      %p148 = pneg %p33
      %p149 = pneg %p57
      %p150 = pneg %p54
      %p151 = pneg %p83
      %p152 = pneg %p80
      %s153 = smul.u32 8, %s15
      %p154 = scmp.lt.s32.totalorder %s153, 15
      %s155 = scalar_select %p154, %s153, 15
      %s156 = smul.addr %s155, 8
      %s157 = scalar_lea.vmem %s2, %s156
      %p158 = pneg %p104
      %p159 = pneg %p101
      %s160 = smul.u32 8, %s15
      %p161 = scmp.lt.s32.totalorder %s160, 15
      %s162 = scalar_select %p161, %s160, 15
      %s163 = smul.addr %s162, 8
      %s164 = scalar_lea.vmem %s0, %s163
      %s165 = smul.u32 8, %s15
      %s166 = smul.u32 8, %s15
      %p167 = scmp.lt.s32.totalorder %s166, 15
      %s168 = scalar_select %p167, %s166, 15
      %s169 = smul.addr %s168, 8
      %s170 = scalar_lea.vmem %s2, %s169
      %s171 = smul.u32 8, %s15
      %p172 = scmp.eq.s32.totalorder %s15, 0
      // Predicated region
      $region29: #{basic_block_pallas.6} parent=27 // pred_check
        %p173 = pneg %p172
      $region30: #{basic_block_pallas.6} parent=27 // pred_check_branch
        %175 = sbr.rel (%p173) target = $region32
      $region31: #{basic_block_pallas.6} parent=27 // pred_region
        %176 = vst [vmem:[%s3] sm:$0x3] 0.0
      $region32: #{basic_block_pallas.6} parent=27 // pred_fallthru
        _
      %v177 = vld [vmem:[%s164] sm:$0xff]
      %v178 = vld [vmem:[%s164 + $0x8] sm:$0xff]
      %v179 = vld [vmem:[%s164 + $0x10] sm:$0xff]
      %v180 = vld [vmem:[%s164 + $0x18] sm:$0xff]
      %v181 = vld [vmem:[%s164 + $0x20] sm:$0xff]
      %v182 = vld [vmem:[%s164 + $0x28] sm:$0xff]
      %v183 = vld [vmem:[%s164 + $0x30] sm:$0xff]
      %v184 = vld [vmem:[%s164 + $0x38] sm:$0xff]
      %v185 = vld [vmem:[%s1] sm:$0xff]
      %v186 = vld [vmem:[%s1 + $0x8] sm:$0xff]
      %v187 = vld [vmem:[%s1 + $0x10] sm:$0xff]
      %v188 = vld [vmem:[%s1 + $0x18] sm:$0xff]
      %v189 = vld [vmem:[%s1 + $0x20] sm:$0xff]
      %v190 = vld [vmem:[%s1 + $0x28] sm:$0xff]
      %v191 = vld [vmem:[%s1 + $0x30] sm:$0xff]
      %v192 = vld [vmem:[%s1 + $0x38] sm:$0xff]
      %v193 = vld [vmem:[%s1 + $0x40] sm:$0xff]
      %v194 = vld [vmem:[%s1 + $0x48] sm:$0xff]
      %v195 = vld [vmem:[%s1 + $0x50] sm:$0xff]
      %v196 = vld [vmem:[%s1 + $0x58] sm:$0xff]
      %v197 = vld [vmem:[%s1 + $0x60] sm:$0xff]
      %v198 = vld [vmem:[%s1 + $0x68] sm:$0xff]
      %v199 = vld [vmem:[%s1 + $0x70] sm:$0xff]
      %v200 = vld [vmem:[%s1 + $0x78] sm:$0xff]
      %201 = vmatprep.subr.mxu0 0.0
      %202 = vmatpush1.msra.mxu0 %v200
      %203 = vmatprep.subr.mxu0 0.0
      %204 = vmatpush1.msra.mxu0 %v199
      %205 = vmatprep.subr.mxu0 0.0
      %206 = vmatpush1.msra.mxu0 %v198
      %207 = vmatprep.subr.mxu0 0.0
      %208 = vmatpush1.msra.mxu0 %v197
      %209 = vmatprep.subr.mxu0 0.0
      %210 = vmatpush1.msra.mxu0 %v196
      %211 = vmatprep.subr.mxu0 0.0
      %212 = vmatpush1.msra.mxu0 %v195
      %213 = vmatprep.subr.mxu0 0.0
      %214 = vmatpush1.msra.mxu0 %v194
      %215 = vmatprep.subr.mxu0 0.0
      %216 = vmatpush1.msra.mxu0 %v193
      %217 = vmatprep.subr.mxu0 0.0
      %218 = vmatpush1.msra.mxu0 %v192
      %219 = vmatprep.subr.mxu0 0.0
      %220 = vmatpush1.msra.mxu0 %v191
      %221 = vmatprep.subr.mxu0 0.0
      %222 = vmatpush1.msra.mxu0 %v190
      %223 = vmatprep.subr.mxu0 0.0
      %224 = vmatpush1.msra.mxu0 %v189
      %225 = vmatprep.subr.mxu0 0.0
      %226 = vmatpush1.msra.mxu0 %v188
      %227 = vmatprep.subr.mxu0 0.0
      %228 = vmatpush1.msra.mxu0 %v187
      %229 = vmatprep.subr.mxu0 0.0
      %230 = vmatpush1.msra.mxu0 %v186
      %231 = vmatprep.subr.mxu0 0.0
      %232 = vmatpush1.msra.mxu0 %v185
      %233 = vmatprep.subr.mxu0 0.0
      %234 = vmatpush2.msra.mxu0 0.0
      %235 = vmatprep.subr.mxu0 0.0
      %236 = vmatpush2.msra.mxu0 0.0
      %237 = vmatprep.subr.mxu0 0.0
      %238 = vmatpush2.msra.mxu0 0.0
      %239 = vmatprep.subr.mxu0 0.0
      %240 = vmatpush2.msra.mxu0 0.0
      %241 = vmatprep.subr.mxu0 0.0
      %242 = vmatpush2.msra.mxu0 0.0
      %243 = vmatprep.subr.mxu0 0.0
      %244 = vmatpush2.msra.mxu0 0.0
      %245 = vmatprep.subr.mxu0 0.0
      %246 = vmatpush2.msra.mxu0 0.0
      %247 = vmatprep.subr.mxu0 0.0
      %248 = vmatpush2.msra.mxu0 0.0
      %249 = vmatprep.subr.mxu0 0.0
      %250 = vmatpush2.msra.mxu0 0.0
      %251 = vmatprep.subr.mxu0 0.0
      %252 = vmatpush2.msra.mxu0 0.0
      %253 = vmatprep.subr.mxu0 0.0
      %254 = vmatpush2.msra.mxu0 0.0
      %255 = vmatprep.subr.mxu0 0.0
      %256 = vmatpush2.msra.mxu0 0.0
      %257 = vmatprep.subr.mxu0 0.0
      %258 = vmatpush2.msra.mxu0 0.0
      %259 = vmatprep.subr.mxu0 0.0
      %260 = vmatpush2.msra.mxu0 0.0
      %261 = vmatprep.subr.mxu0 0.0
      %262 = vmatpush2.msra.mxu0 0.0
      %263 = vmatprep.subr.mxu0 0.0
      %264 = vmatpush2.msra.mxu0 0.0
      %265 = vmatprep.mubr.f32.mxu0 0.0
      %266 = vmatmul.mubr.f32.gmra.mxu0 %v177
      %v267 = vpop.f32.mrf.mxu0
      %v268 = vadd.f32 0.0, %v267
      %v269 = vpop.f32.mrf.mxu0
      %270 = vmatprep.mubr.f32.mxu0 0.0
      %271 = vmatmul.mubr.f32.gmra.mxu0 %v178
      %v272 = vpop.f32.mrf.mxu0
      %v273 = vadd.f32 0.0, %v272
      %v274 = vpop.f32.mrf.mxu0
      %275 = vmatprep.mubr.f32.mxu0 0.0
      %276 = vmatmul.mubr.f32.gmra.mxu0 %v179
      %v277 = vpop.f32.mrf.mxu0
      %v278 = vadd.f32 0.0, %v277
      %v279 = vpop.f32.mrf.mxu0
      %280 = vmatprep.mubr.f32.mxu0 0.0
      %281 = vmatmul.mubr.f32.gmra.mxu0 %v180
      %v282 = vpop.f32.mrf.mxu0
      %v283 = vadd.f32 0.0, %v282
      %v284 = vpop.f32.mrf.mxu0
      %285 = vmatprep.mubr.f32.mxu0 0.0
      %286 = vmatmul.mubr.f32.gmra.mxu0 %v181
      %v287 = vpop.f32.mrf.mxu0
      %v288 = vadd.f32 0.0, %v287
      %v289 = vpop.f32.mrf.mxu0
      %290 = vmatprep.mubr.f32.mxu0 0.0
      %291 = vmatmul.mubr.f32.gmra.mxu0 %v182
      %v292 = vpop.f32.mrf.mxu0
      %v293 = vadd.f32 0.0, %v292
      %v294 = vpop.f32.mrf.mxu0
      %295 = vmatprep.mubr.f32.mxu0 0.0
      %296 = vmatmul.mubr.f32.gmra.mxu0 %v183
      %v297 = vpop.f32.mrf.mxu0
      %v298 = vadd.f32 0.0, %v297
      %v299 = vpop.f32.mrf.mxu0
      %300 = vmatprep.mubr.f32.mxu0 0.0
      %301 = vmatmul.mubr.f32.gmra.mxu0 %v184
      %v302 = vpop.f32.mrf.mxu0
      %v303 = vadd.f32 0.0, %v302
      %v304 = vpop.f32.mrf.mxu0
      %305 = vdwg.mxu0
      %306 = vst [vmem:[%s170] sm:$0xff] %v268
      %307 = vst [vmem:[%s170 + $0x8] sm:$0xff] %v273
      %308 = vst [vmem:[%s170 + $0x10] sm:$0xff] %v278
      %309 = vst [vmem:[%s170 + $0x18] sm:$0xff] %v283
      %310 = vst [vmem:[%s170 + $0x20] sm:$0xff] %v288
      %311 = vst [vmem:[%s170 + $0x28] sm:$0xff] %v293
      %312 = vst [vmem:[%s170 + $0x30] sm:$0xff] %v298
      %313 = vst [vmem:[%s170 + $0x38] sm:$0xff] %v303
      %v314 = vld [vmem:[%s3] sm:$0x3]
      %v315 = vadd.f32 %v268, %v273
      %v316 = vadd.f32 %v315, %v278
      %v317 = vadd.f32 %v316, %v283
      %v318 = vadd.f32 %v317, %v288
      %v319 = vadd.f32 %v318, %v293
      %v320 = vadd.f32 %v319, %v298
      %v321 = vadd.f32 %v320, %v303
      %v322 = vrot.slane %v321, 4
      %v323 = vadd.f32 %v321, %v322
      %v324 = vrot.slane %v323, 2
      %v325 = vadd.f32 %v323, %v324
      %v326 = vrot.slane %v325, 1
      %v327 = vadd.f32 %v325, %v326
      %v328 = vmul.f32 %v268, %v268
      %v329 = vmul.f32 %v273, %v273
      %v330 = vmul.f32 %v278, %v278
      %v331 = vmul.f32 %v283, %v283
      %v332 = vmul.f32 %v288, %v288
      %v333 = vmul.f32 %v293, %v293
      %v334 = vmul.f32 %v298, %v298
      %v335 = vmul.f32 %v303, %v303
      %v336 = vadd.f32 %v328, %v329
      %v337 = vadd.f32 %v336, %v330
      %v338 = vadd.f32 %v337, %v331
      %v339 = vadd.f32 %v338, %v332
      %v340 = vadd.f32 %v339, %v333
      %v341 = vadd.f32 %v340, %v334
      %v342 = vadd.f32 %v341, %v335
      %v343 = vrot.slane %v342, 4
      %v344 = vadd.f32 %v342, %v343
      %v345 = vrot.slane %v344, 2
      %v346 = vadd.f32 %v344, %v345
      %v347 = vrot.slane %v346, 1
      %v348 = vadd.f32 %v346, %v347
      %vm349 = vcmask 1040384
      %v350 = vsel %vm349, %v327, %v348
      %v351 = vadd.f32 %v314, %v350
      %352 = vst [vmem:[%s3] sm:$0x3] %v351
      %s353 = smul.u32 8, %s15
      %p354 = scmp.lt.s32.totalorder %s353, 15
      %s355 = scalar_select %p354, %s353, 15
      %s356 = smul.addr %s355, 8
      %s357 = scalar_lea.vmem %s2, %s356
      // Predicated region
      $region33: #{basic_block_pallas.6} parent=27 // pred_check
        %p358 = pneg %p80
      $region34: #{basic_block_pallas.6} parent=27 // pred_check_branch
        %360 = sbr.rel (%p358) target = $region36
      $region35: #{basic_block_pallas.6} parent=27 // pred_region
        %s361 = smul.u32 8, %s15
      $region36: #{basic_block_pallas.6} parent=27 // pred_fallthru
        _
      // Predicated region
      $region37: #{basic_block_pallas.6} parent=27 // pred_check
        %p362 = pneg %p101
      $region38: #{basic_block_pallas.6} parent=27 // pred_check_branch
        %364 = sbr.rel (%p362) target = $region40
      $region39: #{basic_block_pallas.6} parent=27 // pred_region
        _
      $region40: #{basic_block_pallas.6} parent=27 // pred_fallthru
        _
      // Predicated region
      $region41: #{basic_block_pallas.6} parent=27 // pred_check
        %p365 = pneg %p101
      $region42: #{basic_block_pallas.6} parent=27 // pred_check_branch
        %367 = sbr.rel (%p365) target = $region44
      $region43: #{basic_block_pallas.6} parent=27 // pred_region
        _
      $region44: #{basic_block_pallas.6} parent=27 // pred_fallthru
        _
    $region28: #{basic_block_pallas.6} parent=5 // pred_fallthru
      _
    %p368 = scmp.le.s32.totalorder 2, %s10
    // Predicated region
    $region45: #{basic_block_pallas.6} parent=5 // pred_check
      %p369 = pneg %p368
    $region46: #{basic_block_pallas.6} parent=5 // pred_check_branch
      %371 = sbr.rel (%p369) target = $region48
    $region47: #{basic_block_pallas.6} parent=5 // pred_region
      %s372 = ssub.s32 %s10, 2
      // Predicated region
      $region49: #{basic_block_pallas.6} parent=47 // pred_check
        %p373 = pneg %p86
      $region50: #{basic_block_pallas.6} parent=47 // pred_check_branch
        %375 = sbr.rel (%p373) target = $region52
      $region51: #{basic_block_pallas.6} parent=47 // pred_region
        %s376 = smul.u32 8, %s16
        %p377 = scmp.lt.s32.totalorder %s376, 15
        %s378 = scalar_select %p377, %s376, 15
        %s379 = smul.addr %s378, 8
        %s380 = scalar_lea.vmem %s2, %s379
      $region52: #{basic_block_pallas.6} parent=47 // pred_fallthru
        _
    $region48: #{basic_block_pallas.6} parent=5 // pred_fallthru
      _
  $region6: #{basic_block_pallas.6} parent=0 // loop_footer
    %s14 = sadd.s32 1, %s10
  $region7: #{basic_block_pallas.6} parent=0 // loop_footer_branch
    %9 = sbr.rel target = $region3
  $region8: #{basic_block_pallas.6} parent=0 // loop_exit
    _

// kernel: basic_block_pallas.7
$region0: #{basic_block_pallas.7}
  #allocation0 [shape = 'u32[]', space=smem, size = 0x4, offset = 0x4, fixed_abs, tag = 'smem constant byte address 0x4 - core index']
  #allocation1 [shape = 'u32[144,128]{1,0:T(1,128)}', space=vmem, size = 0x12000, scoped, tag = 'internal scratch']
  %s0 = inlined_call_operand.vmem [shape: f32[128,128], index: 0, kind: input, shape index: {}]
  %s1 = inlined_call_operand.vmem [shape: f32[1,128], index: 1, kind: input, shape index: {}]
  %s2 = inlined_call_operand.vmem [shape: f32[1,128], index: 2, kind: input, shape index: {}]
  %s3 = inlined_call_operand.vmem [shape: f32[128,256], index: 3, kind: input, shape index: {}]
  %s4 = inlined_call_operand.vmem [shape: f32[1,128], index: 4, kind: input, shape index: {}]
  %s5 = inlined_call_operand.vmem [shape: f32[1,128], index: 5, kind: input, shape index: {}]
  %s6 = inlined_call_operand.vmem [shape: f32[128,128], index: 6, kind: output, shape index: {}]
  %s7 = sld [smem:[#allocation0]]
  $region95: #{basic_block_pallas.7} parent=0
    _
  %s9 = ssub.s32 1, %s7
  %s10 = scalar_select 0, %s9, %s7
  $region1: #{basic_block_pallas.7} parent=0
    #allocation2 [shape = 'u8[65536]{0}', space=vmem, size = 0x10000, scoped, tag = 'input window, operand 3']
    loop: start=0, step=1, limit=4
    $region2: #{basic_block_pallas.7} parent=1 // loop_pre_header
      _
    $region3: #{basic_block_pallas.7} parent=1 // loop_header
      %s12 = sphi 0, %s16
      %p13 = scmp.ge.s32.totalorder %s12, 4
      %s22 = sphi 0, %s24
      %s25 = sphi 0, %s22
      %s26 = sphi 0, %s25
      %s42 = sphi 0, %s26
      %s46 = sphi 0, %s46
      %s48 = sphi 0, %s46
      %s49 = sphi 0, %s48
      %s63 = sphi 0, %s49
      %s67 = sphi 0, %s67
      %s69 = sphi 0, %s67
      %s70 = sphi 0, %s69
      %s84 = sphi 0, %s70
      %s90 = sphi 0, %s92
      %s93 = sphi 0, %s90
      %s94 = sphi 0, %s93
      %s110 = sphi 0, %s94
      %s114 = sphi 0, %s114
      %s116 = sphi 0, %s114
      %s117 = sphi 0, %s116
      %s131 = sphi 0, %s117
      %s135 = sphi 0, %s135
      %s137 = sphi 0, %s135
      %s138 = sphi 0, %s137
      %s152 = sphi 0, %s138
      %s158 = sphi 0, %s160
      %s161 = sphi 0, %s158
      %s162 = sphi 0, %s161
      %s178 = sphi 0, %s162
    $region4: #{basic_block_pallas.7} parent=1 // loop_header_branch
      %15 = sbr.rel (%p13) target = $region8
    $region5: #{basic_block_pallas.7} parent=1 // loop_body
      %s17 = ssub.s32 %s12, 1
      %s18 = ssub.s32 %s12, 2
      %s19 = sadd.s32 %s12, 1
      %s20 = ssub.s32 %s12, %s19
      %p21 = scmp.eq.s32.totalorder %s20, 0
      %s23 = sadd.s32 %s22, 1
      %s24 = scalar_select %p21, %s22, %s23
      %p27 = pneg %p21
      %p28 = scmp.eq.s32.totalorder %s12, 1
      %p29 = por %p27, %p28
      %p30 = scmp.ne.s32.totalorder %s22, %s25
      %p31 = scmp.eq.s32.totalorder %s12, 0
      %p32 = por %p30, %p31
      %p33 = scmp.ne.s32.totalorder %s22, %s25
      %p34 = scmp.eq.s32.totalorder %s17, 1
      %p35 = por %p33, %p34
      %p36 = scmp.ne.s32.totalorder %s25, %s26
      %p37 = scmp.eq.s32.totalorder %s17, 0
      %p38 = por %p36, %p37
      %p39 = scmp.ne.s32.totalorder %s25, %s26
      %p40 = scmp.eq.s32.totalorder %s18, 1
      %p41 = por %p39, %p40
      %p43 = scmp.ne.s32.totalorder %s26, %s42
      %p44 = scmp.eq.s32.totalorder %s18, 0
      %p45 = por %p43, %p44
      %s47 = sadd.s32 %s46, 1
      %p50 = scmp.eq.s32.totalorder %s12, 1
      %p51 = scmp.ne.s32.totalorder %s46, %s48
      %p52 = scmp.eq.s32.totalorder %s12, 0
      %p53 = por %p51, %p52
      %p54 = scmp.ne.s32.totalorder %s46, %s48
      %p55 = scmp.eq.s32.totalorder %s17, 1
      %p56 = por %p54, %p55
      %p57 = scmp.ne.s32.totalorder %s48, %s49
      %p58 = scmp.eq.s32.totalorder %s17, 0
      %p59 = por %p57, %p58
      %p60 = scmp.ne.s32.totalorder %s48, %s49
      %p61 = scmp.eq.s32.totalorder %s18, 1
      %p62 = por %p60, %p61
      %p64 = scmp.ne.s32.totalorder %s49, %s63
      %p65 = scmp.eq.s32.totalorder %s18, 0
      %p66 = por %p64, %p65
      %s68 = sadd.s32 %s67, 1
      %p71 = scmp.eq.s32.totalorder %s12, 1
      %p72 = scmp.ne.s32.totalorder %s67, %s69
      %p73 = scmp.eq.s32.totalorder %s12, 0
      %p74 = por %p72, %p73
      %p75 = scmp.ne.s32.totalorder %s67, %s69
      %p76 = scmp.eq.s32.totalorder %s17, 1
      %p77 = por %p75, %p76
      %p78 = scmp.ne.s32.totalorder %s69, %s70
      %p79 = scmp.eq.s32.totalorder %s17, 0
      %p80 = por %p78, %p79
      %p81 = scmp.ne.s32.totalorder %s69, %s70
      %p82 = scmp.eq.s32.totalorder %s18, 1
      %p83 = por %p81, %p82
      %p85 = scmp.ne.s32.totalorder %s70, %s84
      %p86 = scmp.eq.s32.totalorder %s18, 0
      %p87 = por %p85, %p86
      %s88 = ssub.s32 %s12, %s19
      %p89 = scmp.eq.s32.totalorder %s88, 0
      %s91 = sadd.s32 %s90, 1
      %s92 = scalar_select %p89, %s90, %s91
      %p95 = pneg %p89
      %p96 = scmp.eq.s32.totalorder %s12, 1
      %p97 = por %p95, %p96
      %p98 = scmp.ne.s32.totalorder %s90, %s93
      %p99 = scmp.eq.s32.totalorder %s12, 0
      %p100 = por %p98, %p99
      %p101 = scmp.ne.s32.totalorder %s90, %s93
      %p102 = scmp.eq.s32.totalorder %s17, 1
      %p103 = por %p101, %p102
      %p104 = scmp.ne.s32.totalorder %s93, %s94
      %p105 = scmp.eq.s32.totalorder %s17, 0
      %p106 = por %p104, %p105
      %p107 = scmp.ne.s32.totalorder %s93, %s94
      %p108 = scmp.eq.s32.totalorder %s18, 1
      %p109 = por %p107, %p108
      %p111 = scmp.ne.s32.totalorder %s94, %s110
      %p112 = scmp.eq.s32.totalorder %s18, 0
      %p113 = por %p111, %p112
      %s115 = sadd.s32 %s114, 1
      %p118 = scmp.eq.s32.totalorder %s12, 1
      %p119 = scmp.ne.s32.totalorder %s114, %s116
      %p120 = scmp.eq.s32.totalorder %s12, 0
      %p121 = por %p119, %p120
      %p122 = scmp.ne.s32.totalorder %s114, %s116
      %p123 = scmp.eq.s32.totalorder %s17, 1
      %p124 = por %p122, %p123
      %p125 = scmp.ne.s32.totalorder %s116, %s117
      %p126 = scmp.eq.s32.totalorder %s17, 0
      %p127 = por %p125, %p126
      %p128 = scmp.ne.s32.totalorder %s116, %s117
      %p129 = scmp.eq.s32.totalorder %s18, 1
      %p130 = por %p128, %p129
      %p132 = scmp.ne.s32.totalorder %s117, %s131
      %p133 = scmp.eq.s32.totalorder %s18, 0
      %p134 = por %p132, %p133
      %s136 = sadd.s32 %s135, 1
      %p139 = scmp.eq.s32.totalorder %s12, 1
      %p140 = scmp.ne.s32.totalorder %s135, %s137
      %p141 = scmp.eq.s32.totalorder %s12, 0
      %p142 = por %p140, %p141
      %p143 = scmp.ne.s32.totalorder %s135, %s137
      %p144 = scmp.eq.s32.totalorder %s17, 1
      %p145 = por %p143, %p144
      %p146 = scmp.ne.s32.totalorder %s137, %s138
      %p147 = scmp.eq.s32.totalorder %s17, 0
      %p148 = por %p146, %p147
      %p149 = scmp.ne.s32.totalorder %s137, %s138
      %p150 = scmp.eq.s32.totalorder %s18, 1
      %p151 = por %p149, %p150
      %p153 = scmp.ne.s32.totalorder %s138, %s152
      %p154 = scmp.eq.s32.totalorder %s18, 0
      %p155 = por %p153, %p154
      %s156 = ssub.s32 %s12, %s19
      %p157 = scmp.eq.s32.totalorder %s156, 0
      %s159 = sadd.s32 %s158, 1
      %s160 = scalar_select %p157, %s158, %s159
      %p163 = pneg %p157
      %p164 = scmp.eq.s32.totalorder %s12, 1
      %p165 = por %p163, %p164
      %p166 = scmp.ne.s32.totalorder %s158, %s161
      %p167 = scmp.eq.s32.totalorder %s12, 0
      %p168 = por %p166, %p167
      %p169 = scmp.ne.s32.totalorder %s158, %s161
      %p170 = scmp.eq.s32.totalorder %s17, 1
      %p171 = por %p169, %p170
      %p172 = scmp.ne.s32.totalorder %s161, %s162
      %p173 = scmp.eq.s32.totalorder %s17, 0
      %p174 = por %p172, %p173
      %p175 = scmp.ne.s32.totalorder %s161, %s162
      %p176 = scmp.eq.s32.totalorder %s18, 1
      %p177 = por %p175, %p176
      %p179 = scmp.ne.s32.totalorder %s162, %s178
      %p180 = scmp.eq.s32.totalorder %s18, 0
      %p181 = por %p179, %p180
      %p182 = scmp.le.s32.totalorder 1, %s12
      %p183 = scmp.lt.s32.totalorder %s12, 3
      %p184 = pnand %p182, %p183
      %p185 = pneg %p184
      // Predicated region
      $region9: #{basic_block_pallas.7} parent=5 // pred_check
        _
      $region10: #{basic_block_pallas.7} parent=5 // pred_check_branch
        %187 = sbr.rel (%p184) target = $region12
      $region11: #{basic_block_pallas.7} parent=5 // pred_region
        %s188 = ssub.s32 %s12, 1
        // Predicated region
        $region13: #{basic_block_pallas.7} parent=11 // pred_check
          %p189 = pneg %p59
        $region14: #{basic_block_pallas.7} parent=11 // pred_check_branch
          %191 = sbr.rel (%p189) target = $region16
        $region15: #{basic_block_pallas.7} parent=11 // pred_region
          _
        $region16: #{basic_block_pallas.7} parent=11 // pred_fallthru
          _
        // Predicated region
        $region17: #{basic_block_pallas.7} parent=11 // pred_check
          %p192 = pneg %p80
        $region18: #{basic_block_pallas.7} parent=11 // pred_check_branch
          %194 = sbr.rel (%p192) target = $region20
        $region19: #{basic_block_pallas.7} parent=11 // pred_region
          _
        $region20: #{basic_block_pallas.7} parent=11 // pred_fallthru
          _
        // Predicated region
        $region21: #{basic_block_pallas.7} parent=11 // pred_check
          %p195 = pneg %p127
        $region22: #{basic_block_pallas.7} parent=11 // pred_check_branch
          %197 = sbr.rel (%p195) target = $region24
        $region23: #{basic_block_pallas.7} parent=11 // pred_region
          _
        $region24: #{basic_block_pallas.7} parent=11 // pred_fallthru
          _
        // Predicated region
        $region25: #{basic_block_pallas.7} parent=11 // pred_check
          %p198 = pneg %p148
        $region26: #{basic_block_pallas.7} parent=11 // pred_check_branch
          %200 = sbr.rel (%p198) target = $region28
        $region27: #{basic_block_pallas.7} parent=11 // pred_region
          _
        $region28: #{basic_block_pallas.7} parent=11 // pred_fallthru
          _
      $region12: #{basic_block_pallas.7} parent=5 // pred_fallthru
        _
      %p201 = scmp.lt.s32.totalorder %s12, 2
      // Predicated region
      $region29: #{basic_block_pallas.7} parent=5 // pred_check
        %p202 = pneg %p201
      $region30: #{basic_block_pallas.7} parent=5 // pred_check_branch
        %204 = sbr.rel (%p202) target = $region32
      $region31: #{basic_block_pallas.7} parent=5 // pred_region
        // Predicated region
        $region33: #{basic_block_pallas.7} parent=31 // pred_check
          %p205 = pneg %p32
        $region34: #{basic_block_pallas.7} parent=31 // pred_check_branch
          %207 = sbr.rel (%p205) target = $region36
        $region35: #{basic_block_pallas.7} parent=31 // pred_region
          %s208 = smul.u32 8, %s12
          %p209 = scmp.lt.s32.totalorder %s208, 15
          %s210 = scalar_select %p209, %s208, 15
          %s211 = smul.addr %s210, 8
          %s212 = scalar_lea.vmem %s0, %s211
          %s213 = smul.u32 8, %s12
        $region36: #{basic_block_pallas.7} parent=31 // pred_fallthru
          _
        // Predicated region
        $region37: #{basic_block_pallas.7} parent=31 // pred_check
          %p214 = pneg %p100
        $region38: #{basic_block_pallas.7} parent=31 // pred_check_branch
          %216 = sbr.rel (%p214) target = $region40
        $region39: #{basic_block_pallas.7} parent=31 // pred_region
          %s217 = sand.u32 %s90, 1
          %s218 = sand.u32 %s90, 1
          %s219 = smul.addr %s218, 64
          %s220 = scalar_lea.vmem [#allocation2], %s219
          %s221 = smul.u32 8, %s12
          %s222 = smul.addr %s221, 2
          %s223 = sadd.s32 1, %s222
          %s224 = smul.addr %s223, 8
          %s225 = scalar_lea.vmem %s3, %s224
          // Predicated region
          $region41: #{basic_block_pallas.7} parent=39 // pred_check
            _
          $region42: #{basic_block_pallas.7} parent=39 // pred_check_branch
            %227 = sbr.rel (0) target = $region44
          $region43: #{basic_block_pallas.7} parent=39 // pred_region
            // Predicated region
            $region45: #{basic_block_pallas.7} parent=43 // pred_check
              _
            $region46: #{basic_block_pallas.7} parent=43 // pred_check_branch
              %229 = sbr.rel (0) target = $region48
            $region47: #{basic_block_pallas.7} parent=43 // pred_region
              // Predicated region
              $region60: #{basic_block_pallas.7} parent=47 // pred_check
                _
              $region61: #{basic_block_pallas.7} parent=47 // pred_check_branch
                %259 = sbr.rel (0) target = $region63
              $region62: #{basic_block_pallas.7} parent=47 // pred_region
                loop: start=0, step=1, limit=1
                $region64: #{basic_block_pallas.7} parent=62 // loop_pre_header
                  _
                $region65: #{basic_block_pallas.7} parent=62 // loop_header
                  %s261 = sphi 0, %s265
                  %p262 = scmp.ge.s32.totalorder %s261, 1
                  %s266 = sphi %s225, %s225
                  %s267 = sphi %s220, %s220
                $region66: #{basic_block_pallas.7} parent=62 // loop_header_branch
                  %264 = sbr.rel (%p262) target = $region70
                $region67: #{basic_block_pallas.7} parent=62 // loop_body
                  %v268 = vld [vmem:[%s266] sm:$0xff]
                  %269 = vst [vmem:[%s267] sm:$0xff] %v268
                  %v270 = vld [vmem:[%s266 + $0x10] sm:$0xff]
                  %271 = vst [vmem:[%s267 + $0x8] sm:$0xff] %v270
                  %v272 = vld [vmem:[%s266 + $0x20] sm:$0xff]
                  %273 = vst [vmem:[%s267 + $0x10] sm:$0xff] %v272
                  %v274 = vld [vmem:[%s266 + $0x30] sm:$0xff]
                  %275 = vst [vmem:[%s267 + $0x18] sm:$0xff] %v274
                  %v276 = vld [vmem:[%s266 + $0x40] sm:$0xff]
                  %277 = vst [vmem:[%s267 + $0x20] sm:$0xff] %v276
                  %v278 = vld [vmem:[%s266 + $0x50] sm:$0xff]
                  %279 = vst [vmem:[%s267 + $0x28] sm:$0xff] %v278
                  %v280 = vld [vmem:[%s266 + $0x60] sm:$0xff]
                  %281 = vst [vmem:[%s267 + $0x30] sm:$0xff] %v280
                  %v282 = vld [vmem:[%s266 + $0x70] sm:$0xff]
                  %283 = vst [vmem:[%s267 + $0x38] sm:$0xff] %v282
                $region68: #{basic_block_pallas.7} parent=62 // loop_footer
                  %s265 = sadd.s32 1, %s261
                $region69: #{basic_block_pallas.7} parent=62 // loop_footer_branch
                  %260 = sbr.rel target = $region65
                $region70: #{basic_block_pallas.7} parent=62 // loop_exit
                  _
              $region63: #{basic_block_pallas.7} parent=47 // pred_fallthru
                _
              // Predicated region
              $region71: #{basic_block_pallas.7} parent=47 // pred_check
                _
              $region72: #{basic_block_pallas.7} parent=47 // pred_check_branch
                %285 = sbr.rel target = $region74
              $region73: #{basic_block_pallas.7} parent=47 // pred_region
                _
              $region74: #{basic_block_pallas.7} parent=47 // pred_fallthru
                _
            $region48: #{basic_block_pallas.7} parent=43 // pred_fallthru
              _
            // Predicated region
            $region49: #{basic_block_pallas.7} parent=43 // pred_check
              _
            $region50: #{basic_block_pallas.7} parent=43 // pred_check_branch
              %231 = sbr.rel target = $region52
            $region51: #{basic_block_pallas.7} parent=43 // pred_region
              %s233 = ssub.s32 256, 1
              loop: start=0, step=1, limit=1
              $region53: #{basic_block_pallas.7} parent=51 // loop_pre_header
                _
              $region54: #{basic_block_pallas.7} parent=51 // loop_header
                %s235 = sphi 0, %s239
                %p236 = scmp.ge.s32.totalorder %s235, 1
                %s240 = sphi %s225, %s225
                %s241 = sphi %s220, %s220
              $region55: #{basic_block_pallas.7} parent=51 // loop_header_branch
                %238 = sbr.rel (%p236) target = $region59
              $region56: #{basic_block_pallas.7} parent=51 // loop_body
                %v242 = vld [vmem:[%s240] sm:%s233]
                %243 = vst [vmem:[%s241] sm:%s233] %v242
                %v244 = vld [vmem:[%s240 + $0x10] sm:%s233]
                %245 = vst [vmem:[%s241 + $0x8] sm:%s233] %v244
                %v246 = vld [vmem:[%s240 + $0x20] sm:%s233]
                %247 = vst [vmem:[%s241 + $0x10] sm:%s233] %v246
                %v248 = vld [vmem:[%s240 + $0x30] sm:%s233]
                %249 = vst [vmem:[%s241 + $0x18] sm:%s233] %v248
                %v250 = vld [vmem:[%s240 + $0x40] sm:%s233]
                %251 = vst [vmem:[%s241 + $0x20] sm:%s233] %v250
                %v252 = vld [vmem:[%s240 + $0x50] sm:%s233]
                %253 = vst [vmem:[%s241 + $0x28] sm:%s233] %v252
                %v254 = vld [vmem:[%s240 + $0x60] sm:%s233]
                %255 = vst [vmem:[%s241 + $0x30] sm:%s233] %v254
                %v256 = vld [vmem:[%s240 + $0x70] sm:%s233]
                %257 = vst [vmem:[%s241 + $0x38] sm:%s233] %v256
              $region57: #{basic_block_pallas.7} parent=51 // loop_footer
                %s239 = sadd.s32 1, %s235
              $region58: #{basic_block_pallas.7} parent=51 // loop_footer_branch
                %234 = sbr.rel target = $region54
              $region59: #{basic_block_pallas.7} parent=51 // loop_exit
                _
            $region52: #{basic_block_pallas.7} parent=43 // pred_fallthru
              _
          $region44: #{basic_block_pallas.7} parent=39 // pred_fallthru
            _
          %286 = vnop
        $region40: #{basic_block_pallas.7} parent=31 // pred_fallthru
          _
      $region32: #{basic_block_pallas.7} parent=5 // pred_fallthru
        _
      %p287 = scmp.le.s32.totalorder 1, %s12
      %p288 = scmp.lt.s32.totalorder %s12, 3
      %p289 = pnand %p287, %p288
      %p290 = pneg %p289
      // Predicated region
      $region75: #{basic_block_pallas.7} parent=5 // pred_check
        _
      $region76: #{basic_block_pallas.7} parent=5 // pred_check_branch
        %292 = sbr.rel (%p289) target = $region78
      $region77: #{basic_block_pallas.7} parent=5 // pred_region
        %s293 = ssub.s32 %s12, 1
        %s294 = sand.u32 %s93, 1
        %s295 = sand.u32 %s93, 1
        %s296 = smul.addr %s295, 64
        %s297 = scalar_lea.vmem [#allocation2], %s296
        // Predicated region
        $region79: #{basic_block_pallas.7} parent=77 // pred_check
          %p298 = pneg %p106
        $region80: #{basic_block_pallas.7} parent=77 // pred_check_branch
          %300 = sbr.rel (%p298) target = $region82
        $region81: #{basic_block_pallas.7} parent=77 // pred_region
          _
        $region82: #{basic_block_pallas.7} parent=77 // pred_fallthru
          _
        %s301 = smul.u32 8, %s17
        %p302 = scmp.lt.s32.totalorder %s301, 15
        %s303 = scalar_select %p302, %s301, 15
        %s304 = smul.addr %s303, 8
        %s305 = scalar_lea.vmem %s0, %s304
        %p306 = pneg %p38
        %p307 = pneg %p35
        %p308 = pneg %p59
        %p309 = pneg %p56
        %p310 = pneg %p80
        %p311 = pneg %p77
        %s312 = sand.u32 %s93, 1
        %s313 = sand.u32 %s93, 1
        %s314 = smul.addr %s313, 64
        %s315 = scalar_lea.vmem [#allocation2], %s314
        %p316 = pneg %p106
        %p317 = pneg %p103
        %p318 = pneg %p127
        %p319 = pneg %p124
        %p320 = pneg %p148
        %p321 = pneg %p145
        %p322 = pneg %p174
        %p323 = pneg %p171
        %s324 = smul.u32 8, %s17
        %p325 = scmp.lt.s32.totalorder %s324, 15
        %s326 = scalar_select %p325, %s324, 15
        %s327 = smul.addr %s326, 8
        %s328 = scalar_lea.vmem %s6, %s327
        %s329 = smul.u32 8, %s17
        %p330 = scmp.lt.s32.totalorder %s329, 15
        %s331 = scalar_select %p330, %s329, 15
        %s332 = smul.addr %s331, 8
        %s333 = scalar_lea.vmem %s0, %s332
        %s334 = smul.u32 8, %s17
        %s335 = smul.u32 8, %s17
        %s336 = smul.u32 8, %s17
        %p337 = scmp.lt.s32.totalorder %s336, 15
        %s338 = scalar_select %p337, %s336, 15
        %s339 = smul.addr %s338, 8
        %s340 = scalar_lea.vmem %s6, %s339
        %s341 = smul.u32 8, %s17
        %v342 = vld [vmem:[%s333] sm:$0xff]
        %v343 = vld [vmem:[%s333 + $0x8] sm:$0xff]
        %v344 = vld [vmem:[%s333 + $0x10] sm:$0xff]
        %v345 = vld [vmem:[%s333 + $0x18] sm:$0xff]
        %v346 = vld [vmem:[%s333 + $0x20] sm:$0xff]
        %v347 = vld [vmem:[%s333 + $0x28] sm:$0xff]
        %v348 = vld [vmem:[%s333 + $0x30] sm:$0xff]
        %v349 = vld [vmem:[%s333 + $0x38] sm:$0xff]
        %v350 = vld [vmem:[%s1] sm:$0x1]
        %v352 = vlaneseq
        %v353 = vshrl.u32 %v352, 7
        %v354 = vsub.s32 0, %v353
        %v355 = vrot.slane %v350, %v354
        %v357 = vmul.f32 %v342, %v355
        %v358 = vmul.f32 %v343, %v355
        %v359 = vmul.f32 %v344, %v355
        %v360 = vmul.f32 %v345, %v355
        %v361 = vmul.f32 %v346, %v355
        %v362 = vmul.f32 %v347, %v355
        %v363 = vmul.f32 %v348, %v355
        %v364 = vmul.f32 %v349, %v355
        %v365 = vld [vmem:[%s2] sm:$0x1]
        %v367 = vlaneseq
        %v368 = vshrl.u32 %v367, 7
        %v369 = vsub.s32 0, %v368
        %v370 = vrot.slane %v365, %v369
        %v372 = vadd.f32 %v357, %v370
        %v373 = vadd.f32 %v358, %v370
        %v374 = vadd.f32 %v359, %v370
        %v375 = vadd.f32 %v360, %v370
        %v376 = vadd.f32 %v361, %v370
        %v377 = vadd.f32 %v362, %v370
        %v378 = vadd.f32 %v363, %v370
        %v379 = vadd.f32 %v364, %v370
        %v380 = vld [vmem:[%s297] sm:$0xff]
        %v381 = vld [vmem:[%s297 + $0x8] sm:$0xff]
        %v382 = vld [vmem:[%s297 + $0x10] sm:$0xff]
        %v383 = vld [vmem:[%s297 + $0x18] sm:$0xff]
        %v384 = vld [vmem:[%s297 + $0x20] sm:$0xff]
        %v385 = vld [vmem:[%s297 + $0x28] sm:$0xff]
        %v386 = vld [vmem:[%s297 + $0x30] sm:$0xff]
        %v387 = vld [vmem:[%s297 + $0x38] sm:$0xff]
        %v388 = vld [vmem:[%s4] sm:$0x1]
        %v390 = vlaneseq
        %v391 = vshrl.u32 %v390, 7
        %v392 = vsub.s32 0, %v391
        %v393 = vrot.slane %v388, %v392
        %v395 = vmul.f32 %v380, %v393
        %v396 = vmul.f32 %v381, %v393
        %v397 = vmul.f32 %v382, %v393
        %v398 = vmul.f32 %v383, %v393
        %v399 = vmul.f32 %v384, %v393
        %v400 = vmul.f32 %v385, %v393
        %v401 = vmul.f32 %v386, %v393
        %v402 = vmul.f32 %v387, %v393
        %v403 = vadd.f32 %v372, %v395
        %v404 = vadd.f32 %v373, %v396
        %v405 = vadd.f32 %v374, %v397
        %v406 = vadd.f32 %v375, %v398
        %v407 = vadd.f32 %v376, %v399
        %v408 = vadd.f32 %v377, %v400
        %v409 = vadd.f32 %v378, %v401
        %v410 = vadd.f32 %v379, %v402
        %v411 = vld [vmem:[%s5] sm:$0x1]
        %v413 = vlaneseq
        %v414 = vshrl.u32 %v413, 7
        %v415 = vsub.s32 0, %v414
        %v416 = vrot.slane %v411, %v415
        %v418 = vadd.f32 %v403, %v416
        %v419 = vadd.f32 %v404, %v416
        %v420 = vadd.f32 %v405, %v416
        %v421 = vadd.f32 %v406, %v416
        %v422 = vadd.f32 %v407, %v416
        %v423 = vadd.f32 %v408, %v416
        %v424 = vadd.f32 %v409, %v416
        %v425 = vadd.f32 %v410, %v416
        %v426 = vmax.f32 %v418, 0.0
        %v427 = vmax.f32 %v419, 0.0
        %v428 = vmax.f32 %v420, 0.0
        %v429 = vmax.f32 %v421, 0.0
        %v430 = vmax.f32 %v422, 0.0
        %v431 = vmax.f32 %v423, 0.0
        %v432 = vmax.f32 %v424, 0.0
        %v433 = vmax.f32 %v425, 0.0
        %434 = vst [vmem:[%s340] sm:$0xff] %v426
        %435 = vst [vmem:[%s340 + $0x8] sm:$0xff] %v427
        %436 = vst [vmem:[%s340 + $0x10] sm:$0xff] %v428
        %437 = vst [vmem:[%s340 + $0x18] sm:$0xff] %v429
        %438 = vst [vmem:[%s340 + $0x20] sm:$0xff] %v430
        %439 = vst [vmem:[%s340 + $0x28] sm:$0xff] %v431
        %440 = vst [vmem:[%s340 + $0x30] sm:$0xff] %v432
        %441 = vst [vmem:[%s340 + $0x38] sm:$0xff] %v433
        %s442 = smul.u32 8, %s17
        %p443 = scmp.lt.s32.totalorder %s442, 15
        %s444 = scalar_select %p443, %s442, 15
        %s445 = smul.addr %s444, 8
        %s446 = scalar_lea.vmem %s6, %s445
        // Predicated region
        $region83: #{basic_block_pallas.7} parent=77 // pred_check
          %p447 = pneg %p171
        $region84: #{basic_block_pallas.7} parent=77 // pred_check_branch
          %449 = sbr.rel (%p447) target = $region86
        $region85: #{basic_block_pallas.7} parent=77 // pred_region
          %s450 = smul.u32 8, %s17
        $region86: #{basic_block_pallas.7} parent=77 // pred_fallthru
          _
      $region78: #{basic_block_pallas.7} parent=5 // pred_fallthru
        _
      %p451 = scmp.le.s32.totalorder 2, %s12
      // Predicated region
      $region87: #{basic_block_pallas.7} parent=5 // pred_check
        %p452 = pneg %p451
      $region88: #{basic_block_pallas.7} parent=5 // pred_check_branch
        %454 = sbr.rel (%p452) target = $region90
      $region89: #{basic_block_pallas.7} parent=5 // pred_region
        %s455 = ssub.s32 %s12, 2
        // Predicated region
        $region91: #{basic_block_pallas.7} parent=89 // pred_check
          %p456 = pneg %p177
        $region92: #{basic_block_pallas.7} parent=89 // pred_check_branch
          %458 = sbr.rel (%p456) target = $region94
        $region93: #{basic_block_pallas.7} parent=89 // pred_region
          %s459 = smul.u32 8, %s18
          %p460 = scmp.lt.s32.totalorder %s459, 15
          %s461 = scalar_select %p460, %s459, 15
          %s462 = smul.addr %s461, 8
          %s463 = scalar_lea.vmem %s6, %s462
        $region94: #{basic_block_pallas.7} parent=89 // pred_fallthru
          _
      $region90: #{basic_block_pallas.7} parent=5 // pred_fallthru
        _
    $region6: #{basic_block_pallas.7} parent=1 // loop_footer
      %s16 = sadd.s32 1, %s12
    $region7: #{basic_block_pallas.7} parent=1 // loop_footer_branch
      %11 = sbr.rel target = $region3
    $region8: #{basic_block_pallas.7} parent=1 // loop_exit
      _

</llo_original>
